<compile_context>
chip_gen: v7x
topology: tpu7x:2x2x1
jax: 0.10.0
libtpu: 0.0.40
codegen_flags: <defaults>
</compile_context>

<pallas_src>
import functools

import jax
import jax.numpy as jnp
from jax.experimental import pallas as pl
from jax.experimental.pallas import tpu as pltpu


# ----------------------------------------------------------------------------
# Fused BasicBlock kernel (one grid step == one batch image, NHWC layout).
# ----------------------------------------------------------------------------
def _block_kernel(xph_ref, w1_ref, b1_ref, w2_ref, b2_ref, out_ref,
                  ypad_ref, slab1_ref, slab2_ref, *,
                  kh, kw, sh, sw, ph, pw, Hpp, Ho, Wo, Ho2, Wo2,
                  Cin, Cout, cw0, has_shortcut):
    """
    xph_ref : (1, P*Hpp, Wpp, Cin) stride-phase-split, zero-padded input;
              xph[0, p*Hpp + a, b, c] == xpad[sh*a + p//sw, sw*b + p%sw, c]
    w1_ref  : (kh*kw*Cin, Cout)          fused conv1 weight (tap-major K)
    w2_ref  : (kh*kw*Cout [+Cin], Cout)  fused conv2 weight (+ shortcut block)
    b*_ref  : (1, Cout) float32          (b2 already includes shortcut bias)
    out_ref : (1, Ho2, Wo2, Cout)
    ypad_ref: (Ho+2ph, Wbuf, Cout) VMEM stage for ReLU(conv1); zero halo ring,
              interior at rows [ph, ph+Ho), cols [cw0, cw0+Wo), cw0 % 8 == 0.
    slab*_ref: VMEM im2col slabs feeding the two fused matmuls.
    """
    f32 = jnp.float32
    dt = ypad_ref.dtype
    M1, M2 = Ho * Wo, Ho2 * Wo2
    K1 = kh * kw * Cin
    Hbuf, Wbuf = ypad_ref.shape[0], ypad_ref.shape[1]

    # ---------------- conv1: im2col slab + ONE fused matmul -----------------
    for i in range(kh):
        for j in range(kw):
            p = (i % sh) * sw + (j % sw)          # stride phase
            a0, b0 = i // sh, j // sw             # offset inside that phase
            row0 = p * Hpp + a0
            t = i * kw + j
            slab1_ref[:, :, t * Cin:(t + 1) * Cin] = (
                xph_ref[0, row0:row0 + Ho, b0:b0 + Wo, :])
    acc = jnp.dot(slab1_ref[...].reshape(M1, K1), w1_ref[...],
                  preferred_element_type=f32)
    y = jnp.maximum(acc + b1_ref[...].astype(f32), 0.0)          # (M1, Cout)

    # ------- stage ReLU(conv1) zero-padded in VMEM (never hits HBM) ---------
    # Interior is fully overwritten every step; only the halo ring is zeroed
    # (re-zeroed each step so megacore grid partitioning stays safe).
    # NOTE: in bf16 mode conv1 activations are quantized to bf16 here.
    if ph > 0:
        zrow = jnp.zeros((ph, Wbuf, Cout), dt)
        ypad_ref[0:ph, :, :] = zrow
        ypad_ref[ph + Ho:ph + Ho + ph, :, :] = zrow
    if pw > 0:
        zcol = jnp.zeros((Hbuf, pw, Cout), dt)
        ypad_ref[:, cw0 - pw:cw0, :] = zcol
        ypad_ref[:, cw0 + Wo:cw0 + Wo + pw, :] = zcol
    ypad_ref[ph:ph + Ho, cw0:cw0 + Wo, :] = (
        y.reshape(Ho, Wo, Cout).astype(dt))

    # ---- conv2 (+ shortcut folded as extra K columns): ONE fused matmul ----
    for i in range(kh):
        for j in range(kw):
            t = i * kw + j
            c0 = cw0 - pw + j
            slab2_ref[:, :, t * Cout:(t + 1) * Cout] = (
                ypad_ref[i:i + Ho2, c0:c0 + Wo2, :])
    if has_shortcut:
        p_sc = (ph % sh) * sw + (pw % sw)
        row0 = p_sc * Hpp + ph // sh
        b0 = pw // sw
        slab2_ref[:, :, kh * kw * Cout:] = (
            xph_ref[0, row0:row0 + Ho2, b0:b0 + Wo2, :])
    K2 = slab2_ref.shape[2]
    acc2 = jnp.dot(slab2_ref[...].reshape(M2, K2), w2_ref[...],
                   preferred_element_type=f32)
    acc2 = acc2 + b2_ref[...].astype(f32)
    out_ref[...] = (jnp.maximum(acc2, 0.0)
                    .reshape(1, Ho2, Wo2, Cout).astype(out_ref.dtype))


# ----------------------------------------------------------------------------
# BasicBlock_wo_BN forward (add_noise=False):
#   relu(conv2(relu(conv1(x))) + shortcut(x))
# ----------------------------------------------------------------------------
def basic_block_wo_bn_forward(x, params, *, ds_size, kernel_size,
                              if_residual=True, compute_dtype=jnp.bfloat16,
                              nhwc_input=False, nhwc_output=False):
    if nhwc_input:
        N, H, W, Cin = x.shape
        x_nhwc = x
    else:
        N, Cin, H, W = x.shape
        x_nhwc = jnp.transpose(x, (0, 2, 3, 1))                  # NCHW -> NHWC

    w1, b1 = params["w1"], params["b1"]
    w2, b2 = params["w2"], params["b2"]
    Cout = w1.shape[0]
    kh, kw = kernel_size

    if ds_size is None:
        sh, sw = 1, 1
    elif isinstance(ds_size, int):
        sh, sw = ds_size, ds_size
    else:
        sh, sw = ds_size
    ph, pw = (kh - 1) // 2, (kw - 1) // 2

    Hp, Wp = H + 2 * ph, W + 2 * pw
    Ho, Wo = (Hp - kh) // sh + 1, (Wp - kw) // sw + 1
    Ho2, Wo2 = Ho + 2 * ph - kh + 1, Wo + 2 * pw - kw + 1

    # Shortcut mode mirrors the module's (in!=out channels or stride!=1) test.
    if if_residual:
        needs_proj = (Cin != Cout) or (ds_size not in [(1, 1), 1, None])
        shortcut = "conv" if needs_proj else "identity"
        assert (Ho2, Wo2) == (Ho, Wo), "residual add needs matching spatial dims"
    else:
        shortcut = "none"

    dt = compute_dtype
    f32 = jnp.float32

    # --- padded (and, if strided, phase-split) input: the kernel only ever
    #     takes static contiguous slices (in-kernel im2col). ------------------
    Hpp, Wpp = -(-Hp // sh), -(-Wp // sw)                        # ceil div
    xpad = jnp.pad(x_nhwc, ((0, 0),
                            (ph, sh * Hpp - H - ph),
                            (pw, sw * Wpp - W - pw),
                            (0, 0)))
    P = sh * sw
    if P == 1:
        xph = xpad                                   # stride-1 fast path
    else:
        xph = xpad.reshape(N, Hpp, sh, Wpp, sw, Cin)
        xph = xph.transpose(0, 2, 4, 1, 3, 5).reshape(N, P * Hpp, Wpp, Cin)
    xph = xph.astype(dt)

    # --- fused weights: K columns ordered [tap0 | tap1 | ... | shortcut] ----
    K1 = kh * kw * Cin
    w1f = jnp.transpose(w1, (2, 3, 1, 0)).reshape(K1, Cout).astype(dt)
    w2taps = jnp.transpose(w2, (2, 3, 1, 0)).reshape(kh * kw * Cout, Cout)
    b1f = b1.reshape(1, Cout).astype(f32)
    b2_total = b2
    if shortcut == "conv":
        wsc_blk = params["w_sc"].reshape(Cout, Cin).T             # (Cin, Cout)
        b2_total = b2 + params["b_sc"]
        w2f = jnp.concatenate([w2taps, wsc_blk], axis=0)
    elif shortcut == "identity":
        assert Cin == Cout
        w2f = jnp.concatenate([w2taps, jnp.eye(Cout, dtype=w2taps.dtype)],
                              axis=0)
    else:
        w2f = w2taps
    w2f = w2f.astype(dt)
    b2f = b2_total.reshape(1, Cout).astype(f32)
    K2 = w2f.shape[0]
    has_shortcut = shortcut != "none"

    # --- sublane-aligned conv1 stage buffer (interior at col cw0, cw0%8==0) --
    cw0 = 0 if pw == 0 else ((pw + 7) // 8) * 8
    Wbuf = ((cw0 + Wo + pw + 7) // 8) * 8
    Hbuf = Ho + 2 * ph

    kernel = functools.partial(
        _block_kernel, kh=kh, kw=kw, sh=sh, sw=sw, ph=ph, pw=pw, Hpp=Hpp,
        Ho=Ho, Wo=Wo, Ho2=Ho2, Wo2=Wo2, Cin=Cin, Cout=Cout, cw0=cw0,
        has_shortcut=has_shortcut)

    # Explicit VMEM budget (double-buffered I/O blocks + scratch), clamped so
    # it is also valid on v7x's 64 MiB physical VMEM.
    isz = jnp.dtype(dt).itemsize
    osz = jnp.dtype(x.dtype).itemsize
    est = (2 * (P * Hpp * Wpp * Cin + K1 * Cout + K2 * Cout + 2 * Cout) * isz
           + 2 * Ho2 * Wo2 * Cout * osz
           + (Hbuf * Wbuf * Cout + Ho * Wo * K1 + Ho2 * Wo2 * K2) * isz)
    vmem_limit = int(min(max(2 * est, 32 * 1024 * 1024), 64 * 1024 * 1024))

    out = pl.pallas_call(
        kernel,
        out_shape=jax.ShapeDtypeStruct((N, Ho2, Wo2, Cout), x.dtype),
        grid=(N,),
        in_specs=[
            pl.BlockSpec((1, P * Hpp, Wpp, Cin), lambda n: (n, 0, 0, 0)),
            pl.BlockSpec((K1, Cout), lambda n: (0, 0)),
            pl.BlockSpec((1, Cout), lambda n: (0, 0)),
            pl.BlockSpec((K2, Cout), lambda n: (0, 0)),
            pl.BlockSpec((1, Cout), lambda n: (0, 0)),
        ],
        out_specs=pl.BlockSpec((1, Ho2, Wo2, Cout), lambda n: (n, 0, 0, 0)),
        scratch_shapes=[
            pltpu.VMEM((Hbuf, Wbuf, Cout), dt),        # ypad  (conv1 stage)
            pltpu.VMEM((Ho, Wo, K1), dt),              # slab1 (conv1 im2col)
            pltpu.VMEM((Ho2, Wo2, K2), dt),            # slab2 (conv2 im2col)
        ],
        compiler_params=pltpu.CompilerParams(
            dimension_semantics=("parallel",),
            vmem_limit_bytes=vmem_limit),
    )(xph, w1f, b1f, w2f, b2f)

    if nhwc_output:
        return out
    return jnp.transpose(out, (0, 3, 1, 2))                      # back to NCHW


# ----------------------------------------------------------------------------
# Pure-JAX reference for validation
# ----------------------------------------------------------------------------
def _ref_conv(x, w, b, stride, pad):
    out = jax.lax.conv_general_dilated(
        x, w, window_strides=stride,
        padding=[(pad[0], pad[0]), (pad[1], pad[1])],
        dimension_numbers=("NCHW", "OIHW", "NCHW"),
        precision=jax.lax.Precision.HIGHEST)
    return out + b[None, :, None, None]


def _ref_block(x, params, ds_size, kernel_size, if_residual=True):
    kh, kw = kernel_size
    pad = ((kh - 1) // 2, (kw - 1) // 2)
    cin, cout = x.shape[1], params["w1"].shape[0]
    y = jax.nn.relu(_ref_conv(x, params["w1"], params["b1"], ds_size, pad))
    y = _ref_conv(y, params["w2"], params["b2"], (1, 1), pad)
    if if_residual:
        needs_proj = (cin != cout) or (ds_size not in [(1, 1), 1, None])
        sc = (_ref_conv(x, params["w_sc"], params["b_sc"], ds_size, (0, 0))
              if needs_proj else x)
        y = y + sc
    return jax.nn.relu(y)


if __name__ == "__main__":
    key = jax.random.PRNGKey(0)

    def make_params(k, cin, cout, ksz):
        ks = jax.random.split(k, 6)
        return {
            "w1":   0.1 * jax.random.normal(ks[0], (cout, cin, ksz, ksz), jnp.float32),
            "b1":   0.1 * jax.random.normal(ks[1], (cout,), jnp.float32),
            "w2":   0.1 * jax.random.normal(ks[2], (cout, cout, ksz, ksz), jnp.float32),
            "b2":   0.1 * jax.random.normal(ks[3], (cout,), jnp.float32),
            "w_sc": 0.1 * jax.random.normal(ks[4], (cout, cin, 1, 1), jnp.float32),
            "b_sc": 0.1 * jax.random.normal(ks[5], (cout,), jnp.float32),
        }

    kp1, kx1, kp2, kx2 = jax.random.split(key, 4)

    # ---- case 1: projection shortcut (Cin != Cout, stride 2), f32 compute ---
    N, Cin, H, W, Cout, ksz = 2, 4, 16, 16, 8, 3
    params = make_params(kp1, Cin, Cout, ksz)
    x = jax.random.normal(kx1, (N, Cin, H, W), jnp.float32)
    out = basic_block_wo_bn_forward(x, params, ds_size=(2, 2),
                                    kernel_size=(ksz, ksz), if_residual=True,
                                    compute_dtype=jnp.float32)
    out = jax.block_until_ready(out)
    ref = _ref_block(x, params, (2, 2), (ksz, ksz), if_residual=True)
    assert out.shape == (N, Cout, H // 2, W // 2)
    assert jnp.allclose(out, ref, atol=1e-3, rtol=1e-3), "f32 projection mismatch"

    # ---- case 2: identity shortcut (Cin == Cout, stride 1), f32 compute -----
    C = 8
    params2 = make_params(kp2, C, C, ksz)
    x2 = jax.random.normal(kx2, (N, C, H, W), jnp.float32)
    out2 = basic_block_wo_bn_forward(x2, params2, ds_size=(1, 1),
                                     kernel_size=(ksz, ksz), if_residual=True,
                                     compute_dtype=jnp.float32)
    out2 = jax.block_until_ready(out2)
    ref2 = _ref_block(x2, params2, (1, 1), (ksz, ksz), if_residual=True)
    assert out2.shape == (N, C, H, W)
    assert jnp.allclose(out2, ref2, atol=1e-3, rtol=1e-3), "identity mismatch"

    # ---- case 3: no residual branch (if_residual=False), f32 compute --------
    out3 = basic_block_wo_bn_forward(x, params, ds_size=(2, 2),
                                     kernel_size=(ksz, ksz), if_residual=False,
                                     compute_dtype=jnp.float32)
    out3 = jax.block_until_ready(out3)
    ref3 = _ref_block(x, params, (2, 2), (ksz, ksz), if_residual=False)
    assert jnp.allclose(out3, ref3, atol=1e-3, rtol=1e-3), "no-residual mismatch"

    # ---- case 4: default bf16 MXU operands + f32 accumulation (v6e/v7x) -----
    out4 = basic_block_wo_bn_forward(x, params, ds_size=(2, 2),
                                     kernel_size=(ksz, ksz), if_residual=True)
    out4 = jax.block_until_ready(out4)
    assert jnp.allclose(out4, ref, atol=5e-2, rtol=5e-2), "bf16 mismatch"

    print("KERNEL_OK")
</pallas_src>

<mosaic_0001>
module attributes {stable_mosaic.version = 11 : i64} {
  func.func @_block_kernel(%arg0: i32, %arg1: memref<1x36x9x4xf32, #tpu.memory_space<vmem>>, %arg2: memref<36x8xf32, #tpu.memory_space<vmem>>, %arg3: memref<1x8xf32, #tpu.memory_space<vmem>>, %arg4: memref<76x8xf32, #tpu.memory_space<vmem>>, %arg5: memref<1x8xf32, #tpu.memory_space<vmem>>, %arg6: memref<1x8x8x8xf32, #tpu.memory_space<vmem>>, %arg7: memref<10x24x8xf32, #tpu.memory_space<vmem>>, %arg8: memref<8x8x36xf32, #tpu.memory_space<vmem>>, %arg9: memref<8x8x76xf32, #tpu.memory_space<vmem>>) attributes {dimension_semantics = [#tpu.dimension_semantics<parallel>], iteration_bounds = array<i64: 2>, scalar_prefetch = 0 : i64, scratch_operands = 3 : i64, tpu.core_type = #tpu.core_type<tc>, window_params = [{transform_indices = @transform_0, window_bounds = array<i64: 1, 36, 9, 4>}, {pipeline_mode = #tpu.pipeline_mode<synchronous>, transform_indices = @transform_1, window_bounds = array<i64: 36, 8>}, {pipeline_mode = #tpu.pipeline_mode<synchronous>, transform_indices = @transform_2, window_bounds = array<i64: 1, 8>}, {pipeline_mode = #tpu.pipeline_mode<synchronous>, transform_indices = @transform_3, window_bounds = array<i64: 76, 8>}, {pipeline_mode = #tpu.pipeline_mode<synchronous>, transform_indices = @transform_4, window_bounds = array<i64: 1, 8>}, {transform_indices = @transform_5, window_bounds = array<i64: 1, 8, 8, 8>}]} {
    %c0 = arith.constant 0 : index
    %c0_0 = arith.constant 0 : index
    %c0_1 = arith.constant 0 : index
    %c0_2 = arith.constant 0 : index
    %0 = vector.load %arg1[%c0, %c0_0, %c0_1, %c0_2] : memref<1x36x9x4xf32, #tpu.memory_space<vmem>>, vector<1x8x8x4xf32>
    %1 = vector.shape_cast %0 : vector<1x8x8x4xf32> to vector<8x8x4xf32>
    %c0_3 = arith.constant 0 : index
    %c0_4 = arith.constant 0 : index
    %c0_5 = arith.constant 0 : index
    %2 = vector.load %arg8[%c0_3, %c0_4, %c0_5] : memref<8x8x36xf32, #tpu.memory_space<vmem>>, vector<8x8x4xf32>
    tpu.vector_store %arg8[%c0_3, %c0_4, %c0_5], %1 {strides = array<i32>} : memref<8x8x36xf32, #tpu.memory_space<vmem>>, vector<8x8x4xf32>,
    %c0_6 = arith.constant 0 : index
    %c9 = arith.constant 9 : index
    %c0_7 = arith.constant 0 : index
    %c0_8 = arith.constant 0 : index
    %3 = vector.load %arg1[%c0_6, %c9, %c0_7, %c0_8] : memref<1x36x9x4xf32, #tpu.memory_space<vmem>>, vector<1x8x8x4xf32>
    %4 = vector.shape_cast %3 : vector<1x8x8x4xf32> to vector<8x8x4xf32>
    %c0_9 = arith.constant 0 : index
    %c0_10 = arith.constant 0 : index
    %c4 = arith.constant 4 : index
    %5 = vector.load %arg8[%c0_9, %c0_10, %c4] : memref<8x8x36xf32, #tpu.memory_space<vmem>>, vector<8x8x4xf32>
    tpu.vector_store %arg8[%c0_9, %c0_10, %c4], %4 {strides = array<i32>} : memref<8x8x36xf32, #tpu.memory_space<vmem>>, vector<8x8x4xf32>,
    %c0_11 = arith.constant 0 : index
    %c0_12 = arith.constant 0 : index
    %c1 = arith.constant 1 : index
    %c0_13 = arith.constant 0 : index
    %6 = vector.load %arg1[%c0_11, %c0_12, %c1, %c0_13] : memref<1x36x9x4xf32, #tpu.memory_space<vmem>>, vector<1x8x8x4xf32>
    %7 = vector.shape_cast %6 : vector<1x8x8x4xf32> to vector<8x8x4xf32>
    %c0_14 = arith.constant 0 : index
    %c0_15 = arith.constant 0 : index
    %c8 = arith.constant 8 : index
    %8 = vector.load %arg8[%c0_14, %c0_15, %c8] : memref<8x8x36xf32, #tpu.memory_space<vmem>>, vector<8x8x4xf32>
    tpu.vector_store %arg8[%c0_14, %c0_15, %c8], %7 {strides = array<i32>} : memref<8x8x36xf32, #tpu.memory_space<vmem>>, vector<8x8x4xf32>,
    %c0_16 = arith.constant 0 : index
    %c18 = arith.constant 18 : index
    %c0_17 = arith.constant 0 : index
    %c0_18 = arith.constant 0 : index
    %9 = vector.load %arg1[%c0_16, %c18, %c0_17, %c0_18] : memref<1x36x9x4xf32, #tpu.memory_space<vmem>>, vector<1x8x8x4xf32>
    %10 = vector.shape_cast %9 : vector<1x8x8x4xf32> to vector<8x8x4xf32>
    %c0_19 = arith.constant 0 : index
    %c0_20 = arith.constant 0 : index
    %c12 = arith.constant 12 : index
    %11 = vector.load %arg8[%c0_19, %c0_20, %c12] : memref<8x8x36xf32, #tpu.memory_space<vmem>>, vector<8x8x4xf32>
    tpu.vector_store %arg8[%c0_19, %c0_20, %c12], %10 {strides = array<i32>} : memref<8x8x36xf32, #tpu.memory_space<vmem>>, vector<8x8x4xf32>,
    %c0_21 = arith.constant 0 : index
    %c27 = arith.constant 27 : index
    %c0_22 = arith.constant 0 : index
    %c0_23 = arith.constant 0 : index
    %12 = vector.load %arg1[%c0_21, %c27, %c0_22, %c0_23] : memref<1x36x9x4xf32, #tpu.memory_space<vmem>>, vector<1x8x8x4xf32>
    %13 = vector.shape_cast %12 : vector<1x8x8x4xf32> to vector<8x8x4xf32>
    %c0_24 = arith.constant 0 : index
    %c0_25 = arith.constant 0 : index
    %c16 = arith.constant 16 : index
    %14 = vector.load %arg8[%c0_24, %c0_25, %c16] : memref<8x8x36xf32, #tpu.memory_space<vmem>>, vector<8x8x4xf32>
    tpu.vector_store %arg8[%c0_24, %c0_25, %c16], %13 {strides = array<i32>} : memref<8x8x36xf32, #tpu.memory_space<vmem>>, vector<8x8x4xf32>,
    %c0_26 = arith.constant 0 : index
    %c18_27 = arith.constant 18 : index
    %c1_28 = arith.constant 1 : index
    %c0_29 = arith.constant 0 : index
    %15 = vector.load %arg1[%c0_26, %c18_27, %c1_28, %c0_29] : memref<1x36x9x4xf32, #tpu.memory_space<vmem>>, vector<1x8x8x4xf32>
    %16 = vector.shape_cast %15 : vector<1x8x8x4xf32> to vector<8x8x4xf32>
    %c0_30 = arith.constant 0 : index
    %c0_31 = arith.constant 0 : index
    %c20 = arith.constant 20 : index
    %17 = vector.load %arg8[%c0_30, %c0_31, %c20] : memref<8x8x36xf32, #tpu.memory_space<vmem>>, vector<8x8x4xf32>
    tpu.vector_store %arg8[%c0_30, %c0_31, %c20], %16 {strides = array<i32>} : memref<8x8x36xf32, #tpu.memory_space<vmem>>, vector<8x8x4xf32>,
    %c0_32 = arith.constant 0 : index
    %c1_33 = arith.constant 1 : index
    %c0_34 = arith.constant 0 : index
    %c0_35 = arith.constant 0 : index
    %18 = vector.load %arg1[%c0_32, %c1_33, %c0_34, %c0_35] : memref<1x36x9x4xf32, #tpu.memory_space<vmem>>, vector<1x8x8x4xf32>
    %19 = vector.shape_cast %18 : vector<1x8x8x4xf32> to vector<8x8x4xf32>
    %c0_36 = arith.constant 0 : index
    %c0_37 = arith.constant 0 : index
    %c24 = arith.constant 24 : index
    %20 = vector.load %arg8[%c0_36, %c0_37, %c24] : memref<8x8x36xf32, #tpu.memory_space<vmem>>, vector<8x8x4xf32>
    tpu.vector_store %arg8[%c0_36, %c0_37, %c24], %19 {strides = array<i32>} : memref<8x8x36xf32, #tpu.memory_space<vmem>>, vector<8x8x4xf32>,
    %c0_38 = arith.constant 0 : index
    %c10 = arith.constant 10 : index
    %c0_39 = arith.constant 0 : index
    %c0_40 = arith.constant 0 : index
    %21 = vector.load %arg1[%c0_38, %c10, %c0_39, %c0_40] : memref<1x36x9x4xf32, #tpu.memory_space<vmem>>, vector<1x8x8x4xf32>
    %22 = vector.shape_cast %21 : vector<1x8x8x4xf32> to vector<8x8x4xf32>
    %c0_41 = arith.constant 0 : index
    %c0_42 = arith.constant 0 : index
    %c28 = arith.constant 28 : index
    %23 = vector.load %arg8[%c0_41, %c0_42, %c28] : memref<8x8x36xf32, #tpu.memory_space<vmem>>, vector<8x8x4xf32>
    tpu.vector_store %arg8[%c0_41, %c0_42, %c28], %22 {strides = array<i32>} : memref<8x8x36xf32, #tpu.memory_space<vmem>>, vector<8x8x4xf32>,
    %c0_43 = arith.constant 0 : index
    %c1_44 = arith.constant 1 : index
    %c1_45 = arith.constant 1 : index
    %c0_46 = arith.constant 0 : index
    %24 = vector.load %arg1[%c0_43, %c1_44, %c1_45, %c0_46] : memref<1x36x9x4xf32, #tpu.memory_space<vmem>>, vector<1x8x8x4xf32>
    %25 = vector.shape_cast %24 : vector<1x8x8x4xf32> to vector<8x8x4xf32>
    %c0_47 = arith.constant 0 : index
    %c0_48 = arith.constant 0 : index
    %c32 = arith.constant 32 : index
    %26 = vector.load %arg8[%c0_47, %c0_48, %c32] : memref<8x8x36xf32, #tpu.memory_space<vmem>>, vector<8x8x4xf32>
    tpu.vector_store %arg8[%c0_47, %c0_48, %c32], %25 {strides = array<i32>} : memref<8x8x36xf32, #tpu.memory_space<vmem>>, vector<8x8x4xf32>,
    %c0_49 = arith.constant 0 : index
    %c0_50 = arith.constant 0 : index
    %c0_51 = arith.constant 0 : index
    %27 = vector.load %arg8[%c0_49, %c0_50, %c0_51] : memref<8x8x36xf32, #tpu.memory_space<vmem>>, vector<8x8x36xf32>
    %28 = vector.shape_cast %27 : vector<8x8x36xf32> to vector<64x36xf32>
    %c0_52 = arith.constant 0 : index
    %c0_53 = arith.constant 0 : index
    %29 = vector.load %arg2[%c0_52, %c0_53] : memref<36x8xf32, #tpu.memory_space<vmem>>, vector<36x8xf32>
    %cst = arith.constant dense<0.000000e+00> : vector<64x8xf32>
    %30 = tpu.matmul %28, %29, %cst {dimension_numbers = #tpu.dot_dimension_numbers<[1], [0], [0], [1], [0, 0, 1, 1], [], []>} : vector<64x36xf32>, vector<36x8xf32>, vector<64x8xf32> -> vector<64x8xf32>
    %c0_54 = arith.constant 0 : index
    %c0_55 = arith.constant 0 : index
    %31 = vector.load %arg3[%c0_54, %c0_55] : memref<1x8xf32, #tpu.memory_space<vmem>>, vector<1x8xf32>
    %32 = vector.broadcast %31 : vector<1x8xf32> to vector<64x8xf32>
    %33 = arith.addf %30, %32 : vector<64x8xf32>
    %cst_56 = arith.constant 0.000000e+00 : f32
    %34 = vector.broadcast %cst_56 : f32 to vector<64x8xf32>
    %35 = arith.maximumf %33, %34 : vector<64x8xf32>
    %cst_57 = arith.constant 0.000000e+00 : f32
    %36 = vector.broadcast %cst_57 : f32 to vector<1x24x8xf32>
    %c0_58 = arith.constant 0 : index
    %c0_59 = arith.constant 0 : index
    %c0_60 = arith.constant 0 : index
    %37 = vector.load %arg7[%c0_58, %c0_59, %c0_60] : memref<10x24x8xf32, #tpu.memory_space<vmem>>, vector<1x24x8xf32>
    tpu.vector_store %arg7[%c0_58, %c0_59, %c0_60], %36 {strides = array<i32>} : memref<10x24x8xf32, #tpu.memory_space<vmem>>, vector<1x24x8xf32>,
    %c9_61 = arith.constant 9 : index
    %c0_62 = arith.constant 0 : index
    %c0_63 = arith.constant 0 : index
    %38 = vector.load %arg7[%c9_61, %c0_62, %c0_63] : memref<10x24x8xf32, #tpu.memory_space<vmem>>, vector<1x24x8xf32>
    tpu.vector_store %arg7[%c9_61, %c0_62, %c0_63], %36 {strides = array<i32>} : memref<10x24x8xf32, #tpu.memory_space<vmem>>, vector<1x24x8xf32>,
    %cst_64 = arith.constant 0.000000e+00 : f32
    %39 = vector.broadcast %cst_64 : f32 to vector<10x1x8xf32>
    %c0_65 = arith.constant 0 : index
    %c7 = arith.constant 7 : index
    %c0_66 = arith.constant 0 : index
    %40 = vector.load %arg7[%c0_65, %c7, %c0_66] : memref<10x24x8xf32, #tpu.memory_space<vmem>>, vector<10x1x8xf32>
    tpu.vector_store %arg7[%c0_65, %c7, %c0_66], %39 {strides = array<i32>} : memref<10x24x8xf32, #tpu.memory_space<vmem>>, vector<10x1x8xf32>,
    %c0_67 = arith.constant 0 : index
    %c16_68 = arith.constant 16 : index
    %c0_69 = arith.constant 0 : index
    %41 = vector.load %arg7[%c0_67, %c16_68, %c0_69] : memref<10x24x8xf32, #tpu.memory_space<vmem>>, vector<10x1x8xf32>
    tpu.vector_store %arg7[%c0_67, %c16_68, %c0_69], %39 {strides = array<i32>} : memref<10x24x8xf32, #tpu.memory_space<vmem>>, vector<10x1x8xf32>,
    %42 = vector.shape_cast %35 : vector<64x8xf32> to vector<8x8x8xf32>
    %c1_70 = arith.constant 1 : index
    %c8_71 = arith.constant 8 : index
    %c0_72 = arith.constant 0 : index
    %43 = vector.load %arg7[%c1_70, %c8_71, %c0_72] : memref<10x24x8xf32, #tpu.memory_space<vmem>>, vector<8x8x8xf32>
    tpu.vector_store %arg7[%c1_70, %c8_71, %c0_72], %42 {strides = array<i32>} : memref<10x24x8xf32, #tpu.memory_space<vmem>>, vector<8x8x8xf32>,
    %c0_73 = arith.constant 0 : index
    %c7_74 = arith.constant 7 : index
    %c0_75 = arith.constant 0 : index
    %44 = vector.load %arg7[%c0_73, %c7_74, %c0_75] : memref<10x24x8xf32, #tpu.memory_space<vmem>>, vector<8x8x8xf32>
    %c0_76 = arith.constant 0 : index
    %c0_77 = arith.constant 0 : index
    %c0_78 = arith.constant 0 : index
    %45 = vector.load %arg9[%c0_76, %c0_77, %c0_78] : memref<8x8x76xf32, #tpu.memory_space<vmem>>, vector<8x8x8xf32>
    tpu.vector_store %arg9[%c0_76, %c0_77, %c0_78], %44 {strides = array<i32>} : memref<8x8x76xf32, #tpu.memory_space<vmem>>, vector<8x8x8xf32>,
    %c0_79 = arith.constant 0 : index
    %c8_80 = arith.constant 8 : index
    %c0_81 = arith.constant 0 : index
    %46 = vector.load %arg7[%c0_79, %c8_80, %c0_81] : memref<10x24x8xf32, #tpu.memory_space<vmem>>, vector<8x8x8xf32>
    %c0_82 = arith.constant 0 : index
    %c0_83 = arith.constant 0 : index
    %c8_84 = arith.constant 8 : index
    %47 = vector.load %arg9[%c0_82, %c0_83, %c8_84] : memref<8x8x76xf32, #tpu.memory_space<vmem>>, vector<8x8x8xf32>
    tpu.vector_store %arg9[%c0_82, %c0_83, %c8_84], %46 {strides = array<i32>} : memref<8x8x76xf32, #tpu.memory_space<vmem>>, vector<8x8x8xf32>,
    %c0_85 = arith.constant 0 : index
    %c9_86 = arith.constant 9 : index
    %c0_87 = arith.constant 0 : index
    %48 = vector.load %arg7[%c0_85, %c9_86, %c0_87] : memref<10x24x8xf32, #tpu.memory_space<vmem>>, vector<8x8x8xf32>
    %c0_88 = arith.constant 0 : index
    %c0_89 = arith.constant 0 : index
    %c16_90 = arith.constant 16 : index
    %49 = vector.load %arg9[%c0_88, %c0_89, %c16_90] : memref<8x8x76xf32, #tpu.memory_space<vmem>>, vector<8x8x8xf32>
    tpu.vector_store %arg9[%c0_88, %c0_89, %c16_90], %48 {strides = array<i32>} : memref<8x8x76xf32, #tpu.memory_space<vmem>>, vector<8x8x8xf32>,
    %c1_91 = arith.constant 1 : index
    %c7_92 = arith.constant 7 : index
    %c0_93 = arith.constant 0 : index
    %50 = vector.load %arg7[%c1_91, %c7_92, %c0_93] : memref<10x24x8xf32, #tpu.memory_space<vmem>>, vector<8x8x8xf32>
    %c0_94 = arith.constant 0 : index
    %c0_95 = arith.constant 0 : index
    %c24_96 = arith.constant 24 : index
    %51 = vector.load %arg9[%c0_94, %c0_95, %c24_96] : memref<8x8x76xf32, #tpu.memory_space<vmem>>, vector<8x8x8xf32>
    tpu.vector_store %arg9[%c0_94, %c0_95, %c24_96], %50 {strides = array<i32>} : memref<8x8x76xf32, #tpu.memory_space<vmem>>, vector<8x8x8xf32>,
    %c1_97 = arith.constant 1 : index
    %c8_98 = arith.constant 8 : index
    %c0_99 = arith.constant 0 : index
    %52 = vector.load %arg7[%c1_97, %c8_98, %c0_99] : memref<10x24x8xf32, #tpu.memory_space<vmem>>, vector<8x8x8xf32>
    %c0_100 = arith.constant 0 : index
    %c0_101 = arith.constant 0 : index
    %c32_102 = arith.constant 32 : index
    %53 = vector.load %arg9[%c0_100, %c0_101, %c32_102] : memref<8x8x76xf32, #tpu.memory_space<vmem>>, vector<8x8x8xf32>
    tpu.vector_store %arg9[%c0_100, %c0_101, %c32_102], %52 {strides = array<i32>} : memref<8x8x76xf32, #tpu.memory_space<vmem>>, vector<8x8x8xf32>,
    %c1_103 = arith.constant 1 : index
    %c9_104 = arith.constant 9 : index
    %c0_105 = arith.constant 0 : index
    %54 = vector.load %arg7[%c1_103, %c9_104, %c0_105] : memref<10x24x8xf32, #tpu.memory_space<vmem>>, vector<8x8x8xf32>
    %c0_106 = arith.constant 0 : index
    %c0_107 = arith.constant 0 : index
    %c40 = arith.constant 40 : index
    %55 = vector.load %arg9[%c0_106, %c0_107, %c40] : memref<8x8x76xf32, #tpu.memory_space<vmem>>, vector<8x8x8xf32>
    tpu.vector_store %arg9[%c0_106, %c0_107, %c40], %54 {strides = array<i32>} : memref<8x8x76xf32, #tpu.memory_space<vmem>>, vector<8x8x8xf32>,
    %c2 = arith.constant 2 : index
    %c7_108 = arith.constant 7 : index
    %c0_109 = arith.constant 0 : index
    %56 = vector.load %arg7[%c2, %c7_108, %c0_109] : memref<10x24x8xf32, #tpu.memory_space<vmem>>, vector<8x8x8xf32>
    %c0_110 = arith.constant 0 : index
    %c0_111 = arith.constant 0 : index
    %c48 = arith.constant 48 : index
    %57 = vector.load %arg9[%c0_110, %c0_111, %c48] : memref<8x8x76xf32, #tpu.memory_space<vmem>>, vector<8x8x8xf32>
    tpu.vector_store %arg9[%c0_110, %c0_111, %c48], %56 {strides = array<i32>} : memref<8x8x76xf32, #tpu.memory_space<vmem>>, vector<8x8x8xf32>,
    %c2_112 = arith.constant 2 : index
    %c8_113 = arith.constant 8 : index
    %c0_114 = arith.constant 0 : index
    %58 = vector.load %arg7[%c2_112, %c8_113, %c0_114] : memref<10x24x8xf32, #tpu.memory_space<vmem>>, vector<8x8x8xf32>
    %c0_115 = arith.constant 0 : index
    %c0_116 = arith.constant 0 : index
    %c56 = arith.constant 56 : index
    %59 = vector.load %arg9[%c0_115, %c0_116, %c56] : memref<8x8x76xf32, #tpu.memory_space<vmem>>, vector<8x8x8xf32>
    tpu.vector_store %arg9[%c0_115, %c0_116, %c56], %58 {strides = array<i32>} : memref<8x8x76xf32, #tpu.memory_space<vmem>>, vector<8x8x8xf32>,
    %c2_117 = arith.constant 2 : index
    %c9_118 = arith.constant 9 : index
    %c0_119 = arith.constant 0 : index
    %60 = vector.load %arg7[%c2_117, %c9_118, %c0_119] : memref<10x24x8xf32, #tpu.memory_space<vmem>>, vector<8x8x8xf32>
    %c0_120 = arith.constant 0 : index
    %c0_121 = arith.constant 0 : index
    %c64 = arith.constant 64 : index
    %61 = vector.load %arg9[%c0_120, %c0_121, %c64] : memref<8x8x76xf32, #tpu.memory_space<vmem>>, vector<8x8x8xf32>
    tpu.vector_store %arg9[%c0_120, %c0_121, %c64], %60 {strides = array<i32>} : memref<8x8x76xf32, #tpu.memory_space<vmem>>, vector<8x8x8xf32>,
    %c0_122 = arith.constant 0 : index
    %c27_123 = arith.constant 27 : index
    %c0_124 = arith.constant 0 : index
    %c0_125 = arith.constant 0 : index
    %62 = vector.load %arg1[%c0_122, %c27_123, %c0_124, %c0_125] : memref<1x36x9x4xf32, #tpu.memory_space<vmem>>, vector<1x8x8x4xf32>
    %63 = vector.shape_cast %62 : vector<1x8x8x4xf32> to vector<8x8x4xf32>
    %c0_126 = arith.constant 0 : index
    %c0_127 = arith.constant 0 : index
    %c72 = arith.constant 72 : index
    %64 = vector.load %arg9[%c0_126, %c0_127, %c72] : memref<8x8x76xf32, #tpu.memory_space<vmem>>, vector<8x8x4xf32>
    tpu.vector_store %arg9[%c0_126, %c0_127, %c72], %63 {strides = array<i32>} : memref<8x8x76xf32, #tpu.memory_space<vmem>>, vector<8x8x4xf32>,
    %c0_128 = arith.constant 0 : index
    %c0_129 = arith.constant 0 : index
    %c0_130 = arith.constant 0 : index
    %65 = vector.load %arg9[%c0_128, %c0_129, %c0_130] : memref<8x8x76xf32, #tpu.memory_space<vmem>>, vector<8x8x76xf32>
    %66 = vector.shape_cast %65 : vector<8x8x76xf32> to vector<64x76xf32>
    %c0_131 = arith.constant 0 : index
    %c0_132 = arith.constant 0 : index
    %67 = vector.load %arg4[%c0_131, %c0_132] : memref<76x8xf32, #tpu.memory_space<vmem>>, vector<76x8xf32>
    %cst_133 = arith.constant dense<0.000000e+00> : vector<64x8xf32>
    %68 = tpu.matmul %66, %67, %cst_133 {dimension_numbers = #tpu.dot_dimension_numbers<[1], [0], [0], [1], [0, 0, 1, 1], [], []>} : vector<64x76xf32>, vector<76x8xf32>, vector<64x8xf32> -> vector<64x8xf32>
    %c0_134 = arith.constant 0 : index
    %c0_135 = arith.constant 0 : index
    %69 = vector.load %arg5[%c0_134, %c0_135] : memref<1x8xf32, #tpu.memory_space<vmem>>, vector<1x8xf32>
    %70 = vector.broadcast %69 : vector<1x8xf32> to vector<64x8xf32>
    %71 = arith.addf %68, %70 : vector<64x8xf32>
    %cst_136 = arith.constant 0.000000e+00 : f32
    %72 = vector.broadcast %cst_136 : f32 to vector<64x8xf32>
    %73 = arith.maximumf %71, %72 : vector<64x8xf32>
    %74 = vector.shape_cast %73 : vector<64x8xf32> to vector<1x8x8x8xf32>
    %c0_137 = arith.constant 0 : index
    %c0_138 = arith.constant 0 : index
    %c0_139 = arith.constant 0 : index
    %c0_140 = arith.constant 0 : index
    %75 = vector.load %arg6[%c0_137, %c0_138, %c0_139, %c0_140] : memref<1x8x8x8xf32, #tpu.memory_space<vmem>>, vector<1x8x8x8xf32>
    tpu.vector_store %arg6[%c0_137, %c0_138, %c0_139, %c0_140], %74 {strides = array<i32>} : memref<1x8x8x8xf32, #tpu.memory_space<vmem>>, vector<1x8x8x8xf32>,
    return
  }
  func.func @transform_0(%arg0: i32) -> (i32, i32, i32, i32) {
    %c0_i32 = arith.constant 0 : i32
    %c0_i32_0 = arith.constant 0 : i32
    %c0_i32_1 = arith.constant 0 : i32
    %c0_i32_2 = arith.constant 0 : i32
    return %arg0, %c0_i32, %c0_i32_0, %c0_i32_1 : i32, i32, i32, i32
  }
  func.func @transform_1(%arg0: i32) -> (i32, i32) {
    %c0_i32 = arith.constant 0 : i32
    %c0_i32_0 = arith.constant 0 : i32
    %c0_i32_1 = arith.constant 0 : i32
    return %c0_i32, %c0_i32_0 : i32, i32
  }
  func.func @transform_2(%arg0: i32) -> (i32, i32) {
    %c0_i32 = arith.constant 0 : i32
    %c0_i32_0 = arith.constant 0 : i32
    %c0_i32_1 = arith.constant 0 : i32
    return %c0_i32, %c0_i32_0 : i32, i32
  }
  func.func @transform_3(%arg0: i32) -> (i32, i32) {
    %c0_i32 = arith.constant 0 : i32
    %c0_i32_0 = arith.constant 0 : i32
    %c0_i32_1 = arith.constant 0 : i32
    return %c0_i32, %c0_i32_0 : i32, i32
  }
  func.func @transform_4(%arg0: i32) -> (i32, i32) {
    %c0_i32 = arith.constant 0 : i32
    %c0_i32_0 = arith.constant 0 : i32
    %c0_i32_1 = arith.constant 0 : i32
    return %c0_i32, %c0_i32_0 : i32, i32
  }
  func.func @transform_5(%arg0: i32) -> (i32, i32, i32, i32) {
    %c0_i32 = arith.constant 0 : i32
    %c0_i32_0 = arith.constant 0 : i32
    %c0_i32_1 = arith.constant 0 : i32
    %c0_i32_2 = arith.constant 0 : i32
    return %arg0, %c0_i32, %c0_i32_0, %c0_i32_1 : i32, i32, i32, i32
  }
}

</mosaic_0001>

<llo_original>
// kernel: tpu_custom_call.1
$region0: #{tpu_custom_call.1}
  #allocation0 [shape = 'u32[]', space=smem, size = 0x4, offset = 0x4, fixed_abs, tag = 'smem constant byte address 0x4 - core index']
  #allocation1 [shape = 'u32[144,128]{1,0:T(1,128)}', space=vmem, size = 0x12000, scoped, tag = 'internal scratch']
  #allocation2 [shape = 'f32[10,24,8]{2,1,0:T(8,128)}', space=vmem, size = 0x1e000, scoped, tag = 'scratch operand']
  #allocation3 [shape = 'f32[8,8,36]{2,1,0:T(8,128)}', space=vmem, size = 0x8000, scoped, tag = 'scratch operand']
  #allocation4 [shape = 'f32[8,8,76]{2,1,0:T(8,128)}', space=vmem, size = 0x8000, scoped, tag = 'scratch operand']
  %s0 = inlined_call_operand.vmem [shape: f32[2,36,9,4], index: 0, kind: input, shape index: {}]
  %s1 = inlined_call_operand.vmem [shape: f32[36,8], index: 1, kind: input, shape index: {}]
  %s2 = inlined_call_operand.vmem [shape: f32[1,8], index: 2, kind: input, shape index: {}]
  %s3 = inlined_call_operand.vmem [shape: f32[76,8], index: 3, kind: input, shape index: {}]
  %s4 = inlined_call_operand.vmem [shape: f32[1,8], index: 4, kind: input, shape index: {}]
  %s5 = inlined_call_operand.hbm [shape: f32[2,8,8,8], index: 5, kind: output, shape index: {}]
  %s6 = sld [smem:[#allocation0]]
  $region53: #{tpu_custom_call.1} parent=0
    _
  %s8 = ssub.s32 1, %s6
  %s9 = scalar_select 0, %s8, %s6
  $region1: #{tpu_custom_call.1} parent=0
    #allocation5 [shape = 'u8[65536]{0}', space=vmem, size = 0x10000, scoped, tag = 'output window, operand 0']
    #allocation6 [shape = 's32[2]{0}', space=sflag, size = 0x8, scoped, tag = 'scoped memory for tpu_custom_call.1']
    %10 = vsyncpa [#allocation6], 0
    %s11 = scalar_lea.sflag [#allocation6], 1
    %12 = vsyncpa %s11, 0
    loop: start=0, step=1, limit=4
    $region2: #{tpu_custom_call.1} parent=1 // loop_pre_header
      _
    $region3: #{tpu_custom_call.1} parent=1 // loop_header
      %s14 = sphi 0, %s18
      %p15 = scmp.ge.s32.totalorder %s14, 4
      %s24 = sphi 0, %s26
      %s27 = sphi 0, %s24
      %s28 = sphi 0, %s27
      %s44 = sphi 0, %s28
      %s48 = sphi 0, %s48
      %s50 = sphi 0, %s48
      %s51 = sphi 0, %s50
      %s65 = sphi 0, %s51
      %s69 = sphi 0, %s69
      %s71 = sphi 0, %s69
      %s72 = sphi 0, %s71
      %s86 = sphi 0, %s72
      %s90 = sphi 0, %s90
      %s92 = sphi 0, %s90
      %s93 = sphi 0, %s92
      %s107 = sphi 0, %s93
      %s111 = sphi 0, %s111
      %s113 = sphi 0, %s111
      %s114 = sphi 0, %s113
      %s128 = sphi 0, %s114
      %s134 = sphi 0, %s136
      %s137 = sphi 0, %s134
      %s138 = sphi 0, %s137
      %s154 = sphi 0, %s138
    $region4: #{tpu_custom_call.1} parent=1 // loop_header_branch
      %17 = sbr.rel (%p15) target = $region8
    $region5: #{tpu_custom_call.1} parent=1 // loop_body
      %s19 = ssub.s32 %s14, 1
      %s20 = ssub.s32 %s14, 2
      %s21 = sadd.s32 %s14, 1
      %s22 = ssub.s32 %s14, %s21
      %p23 = scmp.eq.s32.totalorder %s22, 0
      %s25 = sadd.s32 %s24, 1
      %s26 = scalar_select %p23, %s24, %s25
      %p29 = pneg %p23
      %p30 = scmp.eq.s32.totalorder %s14, 1
      %p31 = por %p29, %p30
      %p32 = scmp.ne.s32.totalorder %s24, %s27
      %p33 = scmp.eq.s32.totalorder %s14, 0
      %p34 = por %p32, %p33
      %p35 = scmp.ne.s32.totalorder %s24, %s27
      %p36 = scmp.eq.s32.totalorder %s19, 1
      %p37 = por %p35, %p36
      %p38 = scmp.ne.s32.totalorder %s27, %s28
      %p39 = scmp.eq.s32.totalorder %s19, 0
      %p40 = por %p38, %p39
      %p41 = scmp.ne.s32.totalorder %s27, %s28
      %p42 = scmp.eq.s32.totalorder %s20, 1
      %p43 = por %p41, %p42
      %p45 = scmp.ne.s32.totalorder %s28, %s44
      %p46 = scmp.eq.s32.totalorder %s20, 0
      %p47 = por %p45, %p46
      %s49 = sadd.s32 %s48, 1
      %p52 = scmp.eq.s32.totalorder %s14, 1
      %p53 = scmp.ne.s32.totalorder %s48, %s50
      %p54 = scmp.eq.s32.totalorder %s14, 0
      %p55 = por %p53, %p54
      %p56 = scmp.ne.s32.totalorder %s48, %s50
      %p57 = scmp.eq.s32.totalorder %s19, 1
      %p58 = por %p56, %p57
      %p59 = scmp.ne.s32.totalorder %s50, %s51
      %p60 = scmp.eq.s32.totalorder %s19, 0
      %p61 = por %p59, %p60
      %p62 = scmp.ne.s32.totalorder %s50, %s51
      %p63 = scmp.eq.s32.totalorder %s20, 1
      %p64 = por %p62, %p63
      %p66 = scmp.ne.s32.totalorder %s51, %s65
      %p67 = scmp.eq.s32.totalorder %s20, 0
      %p68 = por %p66, %p67
      %s70 = sadd.s32 %s69, 1
      %p73 = scmp.eq.s32.totalorder %s14, 1
      %p74 = scmp.ne.s32.totalorder %s69, %s71
      %p75 = scmp.eq.s32.totalorder %s14, 0
      %p76 = por %p74, %p75
      %p77 = scmp.ne.s32.totalorder %s69, %s71
      %p78 = scmp.eq.s32.totalorder %s19, 1
      %p79 = por %p77, %p78
      %p80 = scmp.ne.s32.totalorder %s71, %s72
      %p81 = scmp.eq.s32.totalorder %s19, 0
      %p82 = por %p80, %p81
      %p83 = scmp.ne.s32.totalorder %s71, %s72
      %p84 = scmp.eq.s32.totalorder %s20, 1
      %p85 = por %p83, %p84
      %p87 = scmp.ne.s32.totalorder %s72, %s86
      %p88 = scmp.eq.s32.totalorder %s20, 0
      %p89 = por %p87, %p88
      %s91 = sadd.s32 %s90, 1
      %p94 = scmp.eq.s32.totalorder %s14, 1
      %p95 = scmp.ne.s32.totalorder %s90, %s92
      %p96 = scmp.eq.s32.totalorder %s14, 0
      %p97 = por %p95, %p96
      %p98 = scmp.ne.s32.totalorder %s90, %s92
      %p99 = scmp.eq.s32.totalorder %s19, 1
      %p100 = por %p98, %p99
      %p101 = scmp.ne.s32.totalorder %s92, %s93
      %p102 = scmp.eq.s32.totalorder %s19, 0
      %p103 = por %p101, %p102
      %p104 = scmp.ne.s32.totalorder %s92, %s93
      %p105 = scmp.eq.s32.totalorder %s20, 1
      %p106 = por %p104, %p105
      %p108 = scmp.ne.s32.totalorder %s93, %s107
      %p109 = scmp.eq.s32.totalorder %s20, 0
      %p110 = por %p108, %p109
      %s112 = sadd.s32 %s111, 1
      %p115 = scmp.eq.s32.totalorder %s14, 1
      %p116 = scmp.ne.s32.totalorder %s111, %s113
      %p117 = scmp.eq.s32.totalorder %s14, 0
      %p118 = por %p116, %p117
      %p119 = scmp.ne.s32.totalorder %s111, %s113
      %p120 = scmp.eq.s32.totalorder %s19, 1
      %p121 = por %p119, %p120
      %p122 = scmp.ne.s32.totalorder %s113, %s114
      %p123 = scmp.eq.s32.totalorder %s19, 0
      %p124 = por %p122, %p123
      %p125 = scmp.ne.s32.totalorder %s113, %s114
      %p126 = scmp.eq.s32.totalorder %s20, 1
      %p127 = por %p125, %p126
      %p129 = scmp.ne.s32.totalorder %s114, %s128
      %p130 = scmp.eq.s32.totalorder %s20, 0
      %p131 = por %p129, %p130
      %s132 = ssub.s32 %s14, %s21
      %p133 = scmp.eq.s32.totalorder %s132, 0
      %s135 = sadd.s32 %s134, 1
      %s136 = scalar_select %p133, %s134, %s135
      %p139 = pneg %p133
      %p140 = scmp.eq.s32.totalorder %s14, 1
      %p141 = por %p139, %p140
      %p142 = scmp.ne.s32.totalorder %s134, %s137
      %p143 = scmp.eq.s32.totalorder %s14, 0
      %p144 = por %p142, %p143
      %p145 = scmp.ne.s32.totalorder %s134, %s137
      %p146 = scmp.eq.s32.totalorder %s19, 1
      %p147 = por %p145, %p146
      %p148 = scmp.ne.s32.totalorder %s137, %s138
      %p149 = scmp.eq.s32.totalorder %s19, 0
      %p150 = por %p148, %p149
      %p151 = scmp.ne.s32.totalorder %s137, %s138
      %p152 = scmp.eq.s32.totalorder %s20, 1
      %p153 = por %p151, %p152
      %p155 = scmp.ne.s32.totalorder %s138, %s154
      %p156 = scmp.eq.s32.totalorder %s20, 0
      %p157 = por %p155, %p156
      %p158 = scmp.le.s32.totalorder 1, %s14
      %p159 = scmp.lt.s32.totalorder %s14, 3
      %p160 = pnand %p158, %p159
      %p161 = pneg %p160
      // Predicated region
      $region9: #{tpu_custom_call.1} parent=5 // pred_check
        _
      $region10: #{tpu_custom_call.1} parent=5 // pred_check_branch
        %163 = sbr.rel (%p160) target = $region12
      $region11: #{tpu_custom_call.1} parent=5 // pred_region
        %s164 = ssub.s32 %s14, 1
        // Predicated region
        $region13: #{tpu_custom_call.1} parent=11 // pred_check
          %p165 = pneg %p61
        $region14: #{tpu_custom_call.1} parent=11 // pred_check_branch
          %167 = sbr.rel (%p165) target = $region16
        $region15: #{tpu_custom_call.1} parent=11 // pred_region
          _
        $region16: #{tpu_custom_call.1} parent=11 // pred_fallthru
          _
        // Predicated region
        $region17: #{tpu_custom_call.1} parent=11 // pred_check
          %p168 = pneg %p82
        $region18: #{tpu_custom_call.1} parent=11 // pred_check_branch
          %170 = sbr.rel (%p168) target = $region20
        $region19: #{tpu_custom_call.1} parent=11 // pred_region
          _
        $region20: #{tpu_custom_call.1} parent=11 // pred_fallthru
          _
        // Predicated region
        $region21: #{tpu_custom_call.1} parent=11 // pred_check
          %p171 = pneg %p103
        $region22: #{tpu_custom_call.1} parent=11 // pred_check_branch
          %173 = sbr.rel (%p171) target = $region24
        $region23: #{tpu_custom_call.1} parent=11 // pred_region
          _
        $region24: #{tpu_custom_call.1} parent=11 // pred_fallthru
          _
        // Predicated region
        $region25: #{tpu_custom_call.1} parent=11 // pred_check
          %p174 = pneg %p124
        $region26: #{tpu_custom_call.1} parent=11 // pred_check_branch
          %176 = sbr.rel (%p174) target = $region28
        $region27: #{tpu_custom_call.1} parent=11 // pred_region
          _
        $region28: #{tpu_custom_call.1} parent=11 // pred_fallthru
          _
      $region12: #{tpu_custom_call.1} parent=5 // pred_fallthru
        _
      %p177 = scmp.lt.s32.totalorder %s14, 2
      // Predicated region
      $region29: #{tpu_custom_call.1} parent=5 // pred_check
        %p178 = pneg %p177
      $region30: #{tpu_custom_call.1} parent=5 // pred_check_branch
        %180 = sbr.rel (%p178) target = $region32
      $region31: #{tpu_custom_call.1} parent=5 // pred_region
        // Predicated region
        $region33: #{tpu_custom_call.1} parent=31 // pred_check
          %p181 = pneg %p34
        $region34: #{tpu_custom_call.1} parent=31 // pred_check_branch
          %183 = sbr.rel (%p181) target = $region36
        $region35: #{tpu_custom_call.1} parent=31 // pred_region
          %p184 = scmp.lt.s32.totalorder %s14, 1
          %s185 = scalar_select %p184, %s14, 1
          %s186 = smul.addr %s185, 72
          %s187 = smul.addr %s186, 8
          %s188 = scalar_lea.vmem %s0, %s187
        $region36: #{tpu_custom_call.1} parent=31 // pred_fallthru
          _
      $region32: #{tpu_custom_call.1} parent=5 // pred_fallthru
        _
      %p189 = scmp.le.s32.totalorder 1, %s14
      %p190 = scmp.lt.s32.totalorder %s14, 3
      %p191 = pnand %p189, %p190
      %p192 = pneg %p191
      // Predicated region
      $region37: #{tpu_custom_call.1} parent=5 // pred_check
        _
      $region38: #{tpu_custom_call.1} parent=5 // pred_check_branch
        %194 = sbr.rel (%p191) target = $region40
      $region39: #{tpu_custom_call.1} parent=5 // pred_region
        %s195 = ssub.s32 %s14, 1
        %p196 = scmp.lt.s32.totalorder %s19, 1
        %s197 = scalar_select %p196, %s19, 1
        %s198 = smul.addr %s197, 72
        %s199 = smul.addr %s198, 8
        %s200 = scalar_lea.vmem %s0, %s199
        %p201 = pneg %p40
        %p202 = pneg %p37
        %p203 = pneg %p61
        %p204 = pneg %p58
        %p205 = pneg %p82
        %p206 = pneg %p79
        %p207 = pneg %p103
        %p208 = pneg %p100
        %p209 = pneg %p124
        %p210 = pneg %p121
        %p211 = pneg %p150
        %p212 = pneg %p147
        %s213 = sand.u32 %s137, 1
        %s214 = scalar_lea.sflag [#allocation6], %s213
        %s215 = sand.u32 %s137, 1
        %s216 = smul.addr %s215, 64
        %s217 = scalar_lea.vmem [#allocation5], %s216
        %p218 = scmp.lt.s32.totalorder %s19, 1
        %s219 = scalar_select %p218, %s19, 1
        %s220 = smul.addr %s219, 72
        %s221 = smul.addr %s220, 8
        %s222 = scalar_lea.vmem %s0, %s221
        %v223 = vld [vmem:[%s222] sm:$0xff]
        %v224 = vld [vmem:[%s222 + $0x10] sm:$0xff]
        %v225 = vld [vmem:[%s222 + $0x20] sm:$0xff]
        %v226 = vld [vmem:[%s222 + $0x30] sm:$0xff]
        %v227 = vld [vmem:[%s222 + $0x40] sm:$0xff]
        %v228 = vld [vmem:[%s222 + $0x50] sm:$0xff]
        %v229 = vld [vmem:[%s222 + $0x60] sm:$0xff]
        %v230 = vld [vmem:[%s222 + $0x70] sm:$0xff]
        %vm231 = vcmask 31744
        %232 = vst.msk [vmem:[#allocation3] sm:$0xff] %vm231, %v223
        %233 = vst.msk [vmem:[#allocation3 + $0x8] sm:$0xff] %vm231, %v224
        %234 = vst.msk [vmem:[#allocation3 + $0x10] sm:$0xff] %vm231, %v225
        %235 = vst.msk [vmem:[#allocation3 + $0x18] sm:$0xff] %vm231, %v226
        %236 = vst.msk [vmem:[#allocation3 + $0x20] sm:$0xff] %vm231, %v227
        %237 = vst.msk [vmem:[#allocation3 + $0x28] sm:$0xff] %vm231, %v228
        %238 = vst.msk [vmem:[#allocation3 + $0x30] sm:$0xff] %vm231, %v229
        %239 = vst.msk [vmem:[#allocation3 + $0x38] sm:$0xff] %vm231, %v230
        %s240 = scalar_lea.vmem %s222, 144
        %v241 = vld [vmem:[%s240] sm:$0xff]
        %v242 = vld [vmem:[%s240 + $0x10] sm:$0xff]
        %v243 = vld [vmem:[%s240 + $0x20] sm:$0xff]
        %v244 = vld [vmem:[%s240 + $0x30] sm:$0xff]
        %v245 = vld [vmem:[%s240 + $0x40] sm:$0xff]
        %v246 = vld [vmem:[%s240 + $0x50] sm:$0xff]
        %v247 = vld [vmem:[%s240 + $0x60] sm:$0xff]
        %v248 = vld [vmem:[%s240 + $0x70] sm:$0xff]
        %257 = vrot.lane.b32.xlu0 %v241, 4
        %v258 = vpop.permute.xlu0 %257
        %259 = vrot.lane.b32.xlu0 %v242, 4
        %v260 = vpop.permute.xlu0 %259
        %261 = vrot.lane.b32.xlu0 %v243, 4
        %v262 = vpop.permute.xlu0 %261
        %263 = vrot.lane.b32.xlu0 %v244, 4
        %v264 = vpop.permute.xlu0 %263
        %265 = vrot.lane.b32.xlu0 %v245, 4
        %v266 = vpop.permute.xlu0 %265
        %267 = vrot.lane.b32.xlu0 %v246, 4
        %v268 = vpop.permute.xlu0 %267
        %269 = vrot.lane.b32.xlu0 %v247, 4
        %v270 = vpop.permute.xlu0 %269
        %271 = vrot.lane.b32.xlu0 %v248, 4
        %v272 = vpop.permute.xlu0 %271
        %vm281 = vcmask 64544
        %282 = vst.msk [vmem:[#allocation3] sm:$0xff] %vm281, %v258
        %283 = vst.msk [vmem:[#allocation3 + $0x8] sm:$0xff] %vm281, %v260
        %284 = vst.msk [vmem:[#allocation3 + $0x10] sm:$0xff] %vm281, %v262
        %285 = vst.msk [vmem:[#allocation3 + $0x18] sm:$0xff] %vm281, %v264
        %286 = vst.msk [vmem:[#allocation3 + $0x20] sm:$0xff] %vm281, %v266
        %287 = vst.msk [vmem:[#allocation3 + $0x28] sm:$0xff] %vm281, %v268
        %288 = vst.msk [vmem:[#allocation3 + $0x30] sm:$0xff] %vm281, %v270
        %289 = vst.msk [vmem:[#allocation3 + $0x38] sm:$0xff] %vm281, %v272
        %v290 = vld [vmem:[%s222 + $0x1] sm:$0xff]
        %v291 = vld [vmem:[%s222 + $0x11] sm:$0xff]
        %v292 = vld [vmem:[%s222 + $0x21] sm:$0xff]
        %v293 = vld [vmem:[%s222 + $0x31] sm:$0xff]
        %v294 = vld [vmem:[%s222 + $0x41] sm:$0xff]
        %v295 = vld [vmem:[%s222 + $0x51] sm:$0xff]
        %v296 = vld [vmem:[%s222 + $0x61] sm:$0xff]
        %v297 = vld [vmem:[%s222 + $0x71] sm:$0xff]
        %306 = vrot.lane.b32.xlu0 %v290, 8
        %v307 = vpop.permute.xlu0 %306
        %308 = vrot.lane.b32.xlu0 %v291, 8
        %v309 = vpop.permute.xlu0 %308
        %310 = vrot.lane.b32.xlu0 %v292, 8
        %v311 = vpop.permute.xlu0 %310
        %312 = vrot.lane.b32.xlu0 %v293, 8
        %v313 = vpop.permute.xlu0 %312
        %314 = vrot.lane.b32.xlu0 %v294, 8
        %v315 = vpop.permute.xlu0 %314
        %316 = vrot.lane.b32.xlu0 %v295, 8
        %v317 = vpop.permute.xlu0 %316
        %318 = vrot.lane.b32.xlu0 %v296, 8
        %v319 = vpop.permute.xlu0 %318
        %320 = vrot.lane.b32.xlu0 %v297, 8
        %v321 = vpop.permute.xlu0 %320
        %vm330 = vcmask 97344
        %331 = vst.msk [vmem:[#allocation3] sm:$0xff] %vm330, %v307
        %332 = vst.msk [vmem:[#allocation3 + $0x8] sm:$0xff] %vm330, %v309
        %333 = vst.msk [vmem:[#allocation3 + $0x10] sm:$0xff] %vm330, %v311
        %334 = vst.msk [vmem:[#allocation3 + $0x18] sm:$0xff] %vm330, %v313
        %335 = vst.msk [vmem:[#allocation3 + $0x20] sm:$0xff] %vm330, %v315
        %336 = vst.msk [vmem:[#allocation3 + $0x28] sm:$0xff] %vm330, %v317
        %337 = vst.msk [vmem:[#allocation3 + $0x30] sm:$0xff] %vm330, %v319
        %338 = vst.msk [vmem:[#allocation3 + $0x38] sm:$0xff] %vm330, %v321
        %s339 = scalar_lea.vmem %s222, 288
        %v340 = vld [vmem:[%s339] sm:$0xff]
        %v341 = vld [vmem:[%s339 + $0x10] sm:$0xff]
        %v342 = vld [vmem:[%s339 + $0x20] sm:$0xff]
        %v343 = vld [vmem:[%s339 + $0x30] sm:$0xff]
        %v344 = vld [vmem:[%s339 + $0x40] sm:$0xff]
        %v345 = vld [vmem:[%s339 + $0x50] sm:$0xff]
        %v346 = vld [vmem:[%s339 + $0x60] sm:$0xff]
        %v347 = vld [vmem:[%s339 + $0x70] sm:$0xff]
        %356 = vrot.lane.b32.xlu0 %v340, 12
        %v357 = vpop.permute.xlu0 %356
        %358 = vrot.lane.b32.xlu0 %v341, 12
        %v359 = vpop.permute.xlu0 %358
        %360 = vrot.lane.b32.xlu0 %v342, 12
        %v361 = vpop.permute.xlu0 %360
        %362 = vrot.lane.b32.xlu0 %v343, 12
        %v363 = vpop.permute.xlu0 %362
        %364 = vrot.lane.b32.xlu0 %v344, 12
        %v365 = vpop.permute.xlu0 %364
        %366 = vrot.lane.b32.xlu0 %v345, 12
        %v367 = vpop.permute.xlu0 %366
        %368 = vrot.lane.b32.xlu0 %v346, 12
        %v369 = vpop.permute.xlu0 %368
        %370 = vrot.lane.b32.xlu0 %v347, 12
        %v371 = vpop.permute.xlu0 %370
        %vm380 = vcmask 130144
        %381 = vst.msk [vmem:[#allocation3] sm:$0xff] %vm380, %v357
        %382 = vst.msk [vmem:[#allocation3 + $0x8] sm:$0xff] %vm380, %v359
        %383 = vst.msk [vmem:[#allocation3 + $0x10] sm:$0xff] %vm380, %v361
        %384 = vst.msk [vmem:[#allocation3 + $0x18] sm:$0xff] %vm380, %v363
        %385 = vst.msk [vmem:[#allocation3 + $0x20] sm:$0xff] %vm380, %v365
        %386 = vst.msk [vmem:[#allocation3 + $0x28] sm:$0xff] %vm380, %v367
        %387 = vst.msk [vmem:[#allocation3 + $0x30] sm:$0xff] %vm380, %v369
        %388 = vst.msk [vmem:[#allocation3 + $0x38] sm:$0xff] %vm380, %v371
        %s389 = scalar_lea.vmem %s222, 432
        %v390 = vld [vmem:[%s389] sm:$0xff]
        %v391 = vld [vmem:[%s389 + $0x10] sm:$0xff]
        %v392 = vld [vmem:[%s389 + $0x20] sm:$0xff]
        %v393 = vld [vmem:[%s389 + $0x30] sm:$0xff]
        %v394 = vld [vmem:[%s389 + $0x40] sm:$0xff]
        %v395 = vld [vmem:[%s389 + $0x50] sm:$0xff]
        %v396 = vld [vmem:[%s389 + $0x60] sm:$0xff]
        %v397 = vld [vmem:[%s389 + $0x70] sm:$0xff]
        %406 = vrot.lane.b32.xlu0 %v390, 16
        %v407 = vpop.permute.xlu0 %406
        %408 = vrot.lane.b32.xlu0 %v391, 16
        %v409 = vpop.permute.xlu0 %408
        %410 = vrot.lane.b32.xlu0 %v392, 16
        %v411 = vpop.permute.xlu0 %410
        %412 = vrot.lane.b32.xlu0 %v393, 16
        %v413 = vpop.permute.xlu0 %412
        %414 = vrot.lane.b32.xlu0 %v394, 16
        %v415 = vpop.permute.xlu0 %414
        %416 = vrot.lane.b32.xlu0 %v395, 16
        %v417 = vpop.permute.xlu0 %416
        %418 = vrot.lane.b32.xlu0 %v396, 16
        %v419 = vpop.permute.xlu0 %418
        %420 = vrot.lane.b32.xlu0 %v397, 16
        %v421 = vpop.permute.xlu0 %420
        %vm430 = vcmask 162944
        %431 = vst.msk [vmem:[#allocation3] sm:$0xff] %vm430, %v407
        %432 = vst.msk [vmem:[#allocation3 + $0x8] sm:$0xff] %vm430, %v409
        %433 = vst.msk [vmem:[#allocation3 + $0x10] sm:$0xff] %vm430, %v411
        %434 = vst.msk [vmem:[#allocation3 + $0x18] sm:$0xff] %vm430, %v413
        %435 = vst.msk [vmem:[#allocation3 + $0x20] sm:$0xff] %vm430, %v415
        %436 = vst.msk [vmem:[#allocation3 + $0x28] sm:$0xff] %vm430, %v417
        %437 = vst.msk [vmem:[#allocation3 + $0x30] sm:$0xff] %vm430, %v419
        %438 = vst.msk [vmem:[#allocation3 + $0x38] sm:$0xff] %vm430, %v421
        %v439 = vld [vmem:[%s339 + $0x1] sm:$0xff]
        %v440 = vld [vmem:[%s339 + $0x11] sm:$0xff]
        %v441 = vld [vmem:[%s339 + $0x21] sm:$0xff]
        %v442 = vld [vmem:[%s339 + $0x31] sm:$0xff]
        %v443 = vld [vmem:[%s339 + $0x41] sm:$0xff]
        %v444 = vld [vmem:[%s339 + $0x51] sm:$0xff]
        %v445 = vld [vmem:[%s339 + $0x61] sm:$0xff]
        %v446 = vld [vmem:[%s339 + $0x71] sm:$0xff]
        %455 = vrot.lane.b32.xlu0 %v439, 20
        %v456 = vpop.permute.xlu0 %455
        %457 = vrot.lane.b32.xlu0 %v440, 20
        %v458 = vpop.permute.xlu0 %457
        %459 = vrot.lane.b32.xlu0 %v441, 20
        %v460 = vpop.permute.xlu0 %459
        %461 = vrot.lane.b32.xlu0 %v442, 20
        %v462 = vpop.permute.xlu0 %461
        %463 = vrot.lane.b32.xlu0 %v443, 20
        %v464 = vpop.permute.xlu0 %463
        %465 = vrot.lane.b32.xlu0 %v444, 20
        %v466 = vpop.permute.xlu0 %465
        %467 = vrot.lane.b32.xlu0 %v445, 20
        %v468 = vpop.permute.xlu0 %467
        %469 = vrot.lane.b32.xlu0 %v446, 20
        %v470 = vpop.permute.xlu0 %469
        %vm479 = vcmask 195744
        %480 = vst.msk [vmem:[#allocation3] sm:$0xff] %vm479, %v456
        %481 = vst.msk [vmem:[#allocation3 + $0x8] sm:$0xff] %vm479, %v458
        %482 = vst.msk [vmem:[#allocation3 + $0x10] sm:$0xff] %vm479, %v460
        %483 = vst.msk [vmem:[#allocation3 + $0x18] sm:$0xff] %vm479, %v462
        %484 = vst.msk [vmem:[#allocation3 + $0x20] sm:$0xff] %vm479, %v464
        %485 = vst.msk [vmem:[#allocation3 + $0x28] sm:$0xff] %vm479, %v466
        %486 = vst.msk [vmem:[#allocation3 + $0x30] sm:$0xff] %vm479, %v468
        %487 = vst.msk [vmem:[#allocation3 + $0x38] sm:$0xff] %vm479, %v470
        %s488 = scalar_lea.vmem %s222, 16
        %v489 = vld [vmem:[%s488] sm:$0xff]
        %v490 = vld [vmem:[%s488 + $0x10] sm:$0xff]
        %v491 = vld [vmem:[%s488 + $0x20] sm:$0xff]
        %v492 = vld [vmem:[%s488 + $0x30] sm:$0xff]
        %v493 = vld [vmem:[%s488 + $0x40] sm:$0xff]
        %v494 = vld [vmem:[%s488 + $0x50] sm:$0xff]
        %v495 = vld [vmem:[%s488 + $0x60] sm:$0xff]
        %v496 = vld [vmem:[%s488 + $0x70] sm:$0xff]
        %505 = vrot.lane.b32.xlu0 %v489, 24
        %v506 = vpop.permute.xlu0 %505
        %507 = vrot.lane.b32.xlu0 %v490, 24
        %v508 = vpop.permute.xlu0 %507
        %509 = vrot.lane.b32.xlu0 %v491, 24
        %v510 = vpop.permute.xlu0 %509
        %511 = vrot.lane.b32.xlu0 %v492, 24
        %v512 = vpop.permute.xlu0 %511
        %513 = vrot.lane.b32.xlu0 %v493, 24
        %v514 = vpop.permute.xlu0 %513
        %515 = vrot.lane.b32.xlu0 %v494, 24
        %v516 = vpop.permute.xlu0 %515
        %517 = vrot.lane.b32.xlu0 %v495, 24
        %v518 = vpop.permute.xlu0 %517
        %519 = vrot.lane.b32.xlu0 %v496, 24
        %v520 = vpop.permute.xlu0 %519
        %vm529 = vcmask 228544
        %530 = vst.msk [vmem:[#allocation3] sm:$0xff] %vm529, %v506
        %531 = vst.msk [vmem:[#allocation3 + $0x8] sm:$0xff] %vm529, %v508
        %532 = vst.msk [vmem:[#allocation3 + $0x10] sm:$0xff] %vm529, %v510
        %533 = vst.msk [vmem:[#allocation3 + $0x18] sm:$0xff] %vm529, %v512
        %534 = vst.msk [vmem:[#allocation3 + $0x20] sm:$0xff] %vm529, %v514
        %535 = vst.msk [vmem:[#allocation3 + $0x28] sm:$0xff] %vm529, %v516
        %536 = vst.msk [vmem:[#allocation3 + $0x30] sm:$0xff] %vm529, %v518
        %537 = vst.msk [vmem:[#allocation3 + $0x38] sm:$0xff] %vm529, %v520
        %s538 = scalar_lea.vmem %s222, 160
        %v539 = vld [vmem:[%s538] sm:$0xff]
        %v540 = vld [vmem:[%s538 + $0x10] sm:$0xff]
        %v541 = vld [vmem:[%s538 + $0x20] sm:$0xff]
        %v542 = vld [vmem:[%s538 + $0x30] sm:$0xff]
        %v543 = vld [vmem:[%s538 + $0x40] sm:$0xff]
        %v544 = vld [vmem:[%s538 + $0x50] sm:$0xff]
        %v545 = vld [vmem:[%s538 + $0x60] sm:$0xff]
        %v546 = vld [vmem:[%s538 + $0x70] sm:$0xff]
        %555 = vrot.lane.b32.xlu0 %v539, 28
        %v556 = vpop.permute.xlu0 %555
        %557 = vrot.lane.b32.xlu0 %v540, 28
        %v558 = vpop.permute.xlu0 %557
        %559 = vrot.lane.b32.xlu0 %v541, 28
        %v560 = vpop.permute.xlu0 %559
        %561 = vrot.lane.b32.xlu0 %v542, 28
        %v562 = vpop.permute.xlu0 %561
        %563 = vrot.lane.b32.xlu0 %v543, 28
        %v564 = vpop.permute.xlu0 %563
        %565 = vrot.lane.b32.xlu0 %v544, 28
        %v566 = vpop.permute.xlu0 %565
        %567 = vrot.lane.b32.xlu0 %v545, 28
        %v568 = vpop.permute.xlu0 %567
        %569 = vrot.lane.b32.xlu0 %v546, 28
        %v570 = vpop.permute.xlu0 %569
        %vm579 = vcmask 261344
        %580 = vst.msk [vmem:[#allocation3] sm:$0xff] %vm579, %v556
        %581 = vst.msk [vmem:[#allocation3 + $0x8] sm:$0xff] %vm579, %v558
        %582 = vst.msk [vmem:[#allocation3 + $0x10] sm:$0xff] %vm579, %v560
        %583 = vst.msk [vmem:[#allocation3 + $0x18] sm:$0xff] %vm579, %v562
        %584 = vst.msk [vmem:[#allocation3 + $0x20] sm:$0xff] %vm579, %v564
        %585 = vst.msk [vmem:[#allocation3 + $0x28] sm:$0xff] %vm579, %v566
        %586 = vst.msk [vmem:[#allocation3 + $0x30] sm:$0xff] %vm579, %v568
        %587 = vst.msk [vmem:[#allocation3 + $0x38] sm:$0xff] %vm579, %v570
        %v588 = vld [vmem:[%s488 + $0x1] sm:$0xff]
        %v589 = vld [vmem:[%s488 + $0x11] sm:$0xff]
        %v590 = vld [vmem:[%s488 + $0x21] sm:$0xff]
        %v591 = vld [vmem:[%s488 + $0x31] sm:$0xff]
        %v592 = vld [vmem:[%s488 + $0x41] sm:$0xff]
        %v593 = vld [vmem:[%s488 + $0x51] sm:$0xff]
        %v594 = vld [vmem:[%s488 + $0x61] sm:$0xff]
        %v595 = vld [vmem:[%s488 + $0x71] sm:$0xff]
        %604 = vrot.lane.b32.xlu0 %v588, 32
        %v605 = vpop.permute.xlu0 %604
        %606 = vrot.lane.b32.xlu0 %v589, 32
        %v607 = vpop.permute.xlu0 %606
        %608 = vrot.lane.b32.xlu0 %v590, 32
        %v609 = vpop.permute.xlu0 %608
        %610 = vrot.lane.b32.xlu0 %v591, 32
        %v611 = vpop.permute.xlu0 %610
        %612 = vrot.lane.b32.xlu0 %v592, 32
        %v613 = vpop.permute.xlu0 %612
        %614 = vrot.lane.b32.xlu0 %v593, 32
        %v615 = vpop.permute.xlu0 %614
        %616 = vrot.lane.b32.xlu0 %v594, 32
        %v617 = vpop.permute.xlu0 %616
        %618 = vrot.lane.b32.xlu0 %v595, 32
        %v619 = vpop.permute.xlu0 %618
        %vm628 = vcmask 294144
        %629 = vst.msk [vmem:[#allocation3] sm:$0xff] %vm628, %v605
        %630 = vst.msk [vmem:[#allocation3 + $0x8] sm:$0xff] %vm628, %v607
        %631 = vst.msk [vmem:[#allocation3 + $0x10] sm:$0xff] %vm628, %v609
        %632 = vst.msk [vmem:[#allocation3 + $0x18] sm:$0xff] %vm628, %v611
        %633 = vst.msk [vmem:[#allocation3 + $0x20] sm:$0xff] %vm628, %v613
        %634 = vst.msk [vmem:[#allocation3 + $0x28] sm:$0xff] %vm628, %v615
        %635 = vst.msk [vmem:[#allocation3 + $0x30] sm:$0xff] %vm628, %v617
        %636 = vst.msk [vmem:[#allocation3 + $0x38] sm:$0xff] %vm628, %v619
        %v637 = vld [vmem:[#allocation3] sm:$0xff]
        %v638 = vld [vmem:[#allocation3 + $0x8] sm:$0xff]
        %v639 = vld [vmem:[#allocation3 + $0x10] sm:$0xff]
        %v640 = vld [vmem:[#allocation3 + $0x18] sm:$0xff]
        %v641 = vld [vmem:[#allocation3 + $0x20] sm:$0xff]
        %v642 = vld [vmem:[#allocation3 + $0x28] sm:$0xff]
        %v643 = vld [vmem:[#allocation3 + $0x30] sm:$0xff]
        %v644 = vld [vmem:[#allocation3 + $0x38] sm:$0xff]
        %v645 = vld [vmem:[%s1] sm:$0xff]
        %v646 = vld [vmem:[%s1 + $0x8] sm:$0xff]
        %v647 = vld [vmem:[%s1 + $0x10] sm:$0xff]
        %v648 = vld [vmem:[%s1 + $0x18] sm:$0xff]
        %v649 = vld [vmem:[%s1 + $0x20] sm:$0xf]
        %v650 = vld [vmem:[%s2] sm:$0x1]
        %v652 = vlaneseq
        %v653 = vshrl.u32 %v652, 7
        %v654 = vsub.s32 0, %v653
        %v655 = vrot.slane %v650, %v654
        %vm657 = vcmask 293888
        %v659 = vsel %vm657, %v637, 0
        %v662 = vsel %vm657, %v638, 0
        %v665 = vsel %vm657, %v639, 0
        %v668 = vsel %vm657, %v640, 0
        %v671 = vsel %vm657, %v641, 0
        %v674 = vsel %vm657, %v642, 0
        %v677 = vsel %vm657, %v643, 0
        %v680 = vsel %vm657, %v644, 0
        %vm682 = vcmask 1043456
        %v684 = vsel %vm682, %v649, 0
        %686 = vmatprep.subr.mxu0 0.0
        %687 = vmatpush1.msra.mxu0 %v645
        %688 = vmatprep.subr.mxu0 0.0
        %689 = vmatpush1.msra.mxu0 %v646
        %690 = vmatprep.subr.mxu0 0.0
        %691 = vmatpush1.msra.mxu0 %v647
        %692 = vmatprep.subr.mxu0 0.0
        %693 = vmatpush1.msra.mxu0 %v648
        %694 = vmatprep.subr.mxu0 0.0
        %695 = vmatpush1.msra.mxu0 %v684
        %696 = vmatprep.subr.mxu0 0.0
        %697 = vmatpush1.msra.mxu0 0.0
        %698 = vmatprep.subr.mxu0 0.0
        %699 = vmatpush1.msra.mxu0 0.0
        %700 = vmatprep.subr.mxu0 0.0
        %701 = vmatpush1.msra.mxu0 0.0
        %702 = vmatprep.subr.mxu0 0.0
        %703 = vmatpush1.msra.mxu0 0.0
        %704 = vmatprep.subr.mxu0 0.0
        %705 = vmatpush1.msra.mxu0 0.0
        %706 = vmatprep.subr.mxu0 0.0
        %707 = vmatpush1.msra.mxu0 0.0
        %708 = vmatprep.subr.mxu0 0.0
        %709 = vmatpush1.msra.mxu0 0.0
        %710 = vmatprep.subr.mxu0 0.0
        %711 = vmatpush1.msra.mxu0 0.0
        %712 = vmatprep.subr.mxu0 0.0
        %713 = vmatpush1.msra.mxu0 0.0
        %714 = vmatprep.subr.mxu0 0.0
        %715 = vmatpush1.msra.mxu0 0.0
        %716 = vmatprep.subr.mxu0 0.0
        %717 = vmatpush1.msra.mxu0 0.0
        %718 = vmatprep.subr.mxu0 0.0
        %719 = vmatpush1.msra.mxu0 0.0
        %720 = vmatprep.subr.mxu0 0.0
        %721 = vmatpush1.msra.mxu0 0.0
        %722 = vmatprep.subr.mxu0 0.0
        %723 = vmatpush1.msra.mxu0 0.0
        %724 = vmatprep.subr.mxu0 0.0
        %725 = vmatpush1.msra.mxu0 0.0
        %726 = vmatprep.subr.mxu0 0.0
        %727 = vmatpush1.msra.mxu0 0.0
        %728 = vmatprep.subr.mxu0 0.0
        %729 = vmatpush1.msra.mxu0 0.0
        %730 = vmatprep.subr.mxu0 0.0
        %731 = vmatpush1.msra.mxu0 0.0
        %732 = vmatprep.subr.mxu0 0.0
        %733 = vmatpush1.msra.mxu0 0.0
        %734 = vmatprep.subr.mxu0 0.0
        %735 = vmatpush1.msra.mxu0 0.0
        %736 = vmatprep.subr.mxu0 0.0
        %737 = vmatpush1.msra.mxu0 0.0
        %738 = vmatprep.subr.mxu0 0.0
        %739 = vmatpush1.msra.mxu0 0.0
        %740 = vmatprep.subr.mxu0 0.0
        %741 = vmatpush1.msra.mxu0 0.0
        %742 = vmatprep.subr.mxu0 0.0
        %743 = vmatpush1.msra.mxu0 0.0
        %744 = vmatprep.subr.mxu0 0.0
        %745 = vmatpush1.msra.mxu0 0.0
        %746 = vmatprep.subr.mxu0 0.0
        %747 = vmatpush1.msra.mxu0 0.0
        %748 = vmatprep.subr.mxu0 0.0
        %749 = vmatpush1.msra.mxu0 0.0
        %750 = vmatprep.mubr.f32.mxu0 0.0
        %751 = vmatmul.mubr.f32.gmra.mrb[0].mxu0 %v659
        %v752 = vpop.f32.mrb[0].mxu0
        %v753 = vadd.f32 %v655, %v752
        %v754 = vpop.f32.mrb[0].mxu0
        %755 = vmatprep.mubr.f32.mxu0 0.0
        %756 = vmatmul.mubr.f32.gmra.mrb[0].mxu0 %v662
        %v757 = vpop.f32.mrb[0].mxu0
        %v758 = vadd.f32 %v655, %v757
        %v759 = vpop.f32.mrb[0].mxu0
        %760 = vmatprep.mubr.f32.mxu0 0.0
        %761 = vmatmul.mubr.f32.gmra.mrb[0].mxu0 %v665
        %v762 = vpop.f32.mrb[0].mxu0
        %v763 = vadd.f32 %v655, %v762
        %v764 = vpop.f32.mrb[0].mxu0
        %765 = vmatprep.mubr.f32.mxu0 0.0
        %766 = vmatmul.mubr.f32.gmra.mrb[0].mxu0 %v668
        %v767 = vpop.f32.mrb[0].mxu0
        %v768 = vadd.f32 %v655, %v767
        %v769 = vpop.f32.mrb[0].mxu0
        %770 = vmatprep.mubr.f32.mxu0 0.0
        %771 = vmatmul.mubr.f32.gmra.mrb[0].mxu0 %v671
        %v772 = vpop.f32.mrb[0].mxu0
        %v773 = vadd.f32 %v655, %v772
        %v774 = vpop.f32.mrb[0].mxu0
        %775 = vmatprep.mubr.f32.mxu0 0.0
        %776 = vmatmul.mubr.f32.gmra.mrb[0].mxu0 %v674
        %v777 = vpop.f32.mrb[0].mxu0
        %v778 = vadd.f32 %v655, %v777
        %v779 = vpop.f32.mrb[0].mxu0
        %780 = vmatprep.mubr.f32.mxu0 0.0
        %781 = vmatmul.mubr.f32.gmra.mrb[0].mxu0 %v677
        %v782 = vpop.f32.mrb[0].mxu0
        %v783 = vadd.f32 %v655, %v782
        %v784 = vpop.f32.mrb[0].mxu0
        %785 = vmatprep.mubr.f32.mxu0 0.0
        %786 = vmatmul.mubr.f32.gmra.mrb[0].mxu0 %v680
        %v787 = vpop.f32.mrb[0].mxu0
        %v788 = vadd.f32 %v655, %v787
        %v789 = vpop.f32.mrb[0].mxu0
        %790 = vdwg.mxu0
        %v791 = vmax.f32 %v753, 0.0
        %v792 = vmax.f32 %v758, 0.0
        %v793 = vmax.f32 %v763, 0.0
        %v794 = vmax.f32 %v768, 0.0
        %v795 = vmax.f32 %v773, 0.0
        %v796 = vmax.f32 %v778, 0.0
        %v797 = vmax.f32 %v783, 0.0
        %v798 = vmax.f32 %v788, 0.0
        %vm799 = vcmask 64512
        %800 = vst.msk [vmem:[#allocation2] sm:$0xff] %vm799, 0.0
        %801 = vst.msk [vmem:[#allocation2 + $0x8] sm:$0xff] %vm799, 0.0
        %802 = vst.msk [vmem:[#allocation2 + $0x10] sm:$0xff] %vm799, 0.0
        %s803 = scalar_lea.vmem [#allocation2], 216
        %804 = vst.msk [vmem:[%s803] sm:$0xff] %vm799, 0.0
        %805 = vst.msk [vmem:[%s803 + $0x8] sm:$0xff] %vm799, 0.0
        %806 = vst.msk [vmem:[%s803 + $0x10] sm:$0xff] %vm799, 0.0
        %vm807 = vcmask 57344
        %808 = vst.msk [vmem:[#allocation2 + $0x7] sm:$0x1] %vm807, 0.0
        %809 = vst.msk [vmem:[#allocation2 + $0x1f] sm:$0x1] %vm807, 0.0
        %810 = vst.msk [vmem:[#allocation2 + $0x37] sm:$0x1] %vm807, 0.0
        %811 = vst.msk [vmem:[#allocation2 + $0x4f] sm:$0x1] %vm807, 0.0
        %812 = vst.msk [vmem:[#allocation2 + $0x67] sm:$0x1] %vm807, 0.0
        %813 = vst.msk [vmem:[#allocation2 + $0x7f] sm:$0x1] %vm807, 0.0
        %814 = vst.msk [vmem:[#allocation2 + $0x97] sm:$0x1] %vm807, 0.0
        %815 = vst.msk [vmem:[#allocation2 + $0xaf] sm:$0x1] %vm807, 0.0
        %816 = vst.msk [vmem:[#allocation2 + $0xc7] sm:$0x1] %vm807, 0.0
        %817 = vst.msk [vmem:[#allocation2 + $0xdf] sm:$0x1] %vm807, 0.0
        %818 = vst.msk [vmem:[#allocation2 + $0x10] sm:$0x1] %vm807, 0.0
        %819 = vst.msk [vmem:[#allocation2 + $0x28] sm:$0x1] %vm807, 0.0
        %820 = vst.msk [vmem:[#allocation2 + $0x40] sm:$0x1] %vm807, 0.0
        %821 = vst.msk [vmem:[#allocation2 + $0x58] sm:$0x1] %vm807, 0.0
        %822 = vst.msk [vmem:[#allocation2 + $0x70] sm:$0x1] %vm807, 0.0
        %823 = vst.msk [vmem:[#allocation2 + $0x88] sm:$0x1] %vm807, 0.0
        %824 = vst.msk [vmem:[#allocation2 + $0xa0] sm:$0x1] %vm807, 0.0
        %825 = vst.msk [vmem:[#allocation2 + $0xb8] sm:$0x1] %vm807, 0.0
        %826 = vst.msk [vmem:[#allocation2 + $0xd0] sm:$0x1] %vm807, 0.0
        %827 = vst.msk [vmem:[#allocation2 + $0xe8] sm:$0x1] %vm807, 0.0
        %s828 = scalar_lea.vmem [#allocation2], 24
        %829 = vst.msk [vmem:[%s828 + $0x8] sm:$0xff] %vm799, %v791
        %830 = vst.msk [vmem:[%s828 + $0x20] sm:$0xff] %vm799, %v792
        %831 = vst.msk [vmem:[%s828 + $0x38] sm:$0xff] %vm799, %v793
        %832 = vst.msk [vmem:[%s828 + $0x50] sm:$0xff] %vm799, %v794
        %833 = vst.msk [vmem:[%s828 + $0x68] sm:$0xff] %vm799, %v795
        %834 = vst.msk [vmem:[%s828 + $0x80] sm:$0xff] %vm799, %v796
        %835 = vst.msk [vmem:[%s828 + $0x98] sm:$0xff] %vm799, %v797
        %836 = vst.msk [vmem:[%s828 + $0xb0] sm:$0xff] %vm799, %v798
        %v837 = vld [vmem:[#allocation2 + $0x7] sm:$0xff]
        %v838 = vld [vmem:[#allocation2 + $0x1f] sm:$0xff]
        %v839 = vld [vmem:[#allocation2 + $0x37] sm:$0xff]
        %v840 = vld [vmem:[#allocation2 + $0x4f] sm:$0xff]
        %v841 = vld [vmem:[#allocation2 + $0x67] sm:$0xff]
        %v842 = vld [vmem:[#allocation2 + $0x7f] sm:$0xff]
        %v843 = vld [vmem:[#allocation2 + $0x97] sm:$0xff]
        %v844 = vld [vmem:[#allocation2 + $0xaf] sm:$0xff]
        %845 = vst.msk [vmem:[#allocation4] sm:$0xff] %vm799, %v837
        %846 = vst.msk [vmem:[#allocation4 + $0x8] sm:$0xff] %vm799, %v838
        %847 = vst.msk [vmem:[#allocation4 + $0x10] sm:$0xff] %vm799, %v839
        %848 = vst.msk [vmem:[#allocation4 + $0x18] sm:$0xff] %vm799, %v840
        %849 = vst.msk [vmem:[#allocation4 + $0x20] sm:$0xff] %vm799, %v841
        %850 = vst.msk [vmem:[#allocation4 + $0x28] sm:$0xff] %vm799, %v842
        %851 = vst.msk [vmem:[#allocation4 + $0x30] sm:$0xff] %vm799, %v843
        %852 = vst.msk [vmem:[#allocation4 + $0x38] sm:$0xff] %vm799, %v844
        %v853 = vld [vmem:[#allocation2 + $0x8] sm:$0xff]
        %v854 = vld [vmem:[#allocation2 + $0x20] sm:$0xff]
        %v855 = vld [vmem:[#allocation2 + $0x38] sm:$0xff]
        %v856 = vld [vmem:[#allocation2 + $0x50] sm:$0xff]
        %v857 = vld [vmem:[#allocation2 + $0x68] sm:$0xff]
        %v858 = vld [vmem:[#allocation2 + $0x80] sm:$0xff]
        %v859 = vld [vmem:[#allocation2 + $0x98] sm:$0xff]
        %v860 = vld [vmem:[#allocation2 + $0xb0] sm:$0xff]
        %869 = vrot.lane.b32.xlu0 %v853, 8
        %v870 = vpop.permute.xlu0 %869
        %871 = vrot.lane.b32.xlu0 %v854, 8
        %v872 = vpop.permute.xlu0 %871
        %873 = vrot.lane.b32.xlu0 %v855, 8
        %v874 = vpop.permute.xlu0 %873
        %875 = vrot.lane.b32.xlu0 %v856, 8
        %v876 = vpop.permute.xlu0 %875
        %877 = vrot.lane.b32.xlu0 %v857, 8
        %v878 = vpop.permute.xlu0 %877
        %879 = vrot.lane.b32.xlu0 %v858, 8
        %v880 = vpop.permute.xlu0 %879
        %881 = vrot.lane.b32.xlu0 %v859, 8
        %v882 = vpop.permute.xlu0 %881
        %883 = vrot.lane.b32.xlu0 %v860, 8
        %v884 = vpop.permute.xlu0 %883
        %vm893 = vcmask 130112
        %894 = vst.msk [vmem:[#allocation4] sm:$0xff] %vm893, %v870
        %895 = vst.msk [vmem:[#allocation4 + $0x8] sm:$0xff] %vm893, %v872
        %896 = vst.msk [vmem:[#allocation4 + $0x10] sm:$0xff] %vm893, %v874
        %897 = vst.msk [vmem:[#allocation4 + $0x18] sm:$0xff] %vm893, %v876
        %898 = vst.msk [vmem:[#allocation4 + $0x20] sm:$0xff] %vm893, %v878
        %899 = vst.msk [vmem:[#allocation4 + $0x28] sm:$0xff] %vm893, %v880
        %900 = vst.msk [vmem:[#allocation4 + $0x30] sm:$0xff] %vm893, %v882
        %901 = vst.msk [vmem:[#allocation4 + $0x38] sm:$0xff] %vm893, %v884
        %v902 = vld [vmem:[#allocation2 + $0x9] sm:$0xff]
        %v903 = vld [vmem:[#allocation2 + $0x21] sm:$0xff]
        %v904 = vld [vmem:[#allocation2 + $0x39] sm:$0xff]
        %v905 = vld [vmem:[#allocation2 + $0x51] sm:$0xff]
        %v906 = vld [vmem:[#allocation2 + $0x69] sm:$0xff]
        %v907 = vld [vmem:[#allocation2 + $0x81] sm:$0xff]
        %v908 = vld [vmem:[#allocation2 + $0x99] sm:$0xff]
        %v909 = vld [vmem:[#allocation2 + $0xb1] sm:$0xff]
        %918 = vrot.lane.b32.xlu0 %v902, 16
        %v919 = vpop.permute.xlu0 %918
        %920 = vrot.lane.b32.xlu0 %v903, 16
        %v921 = vpop.permute.xlu0 %920
        %922 = vrot.lane.b32.xlu0 %v904, 16
        %v923 = vpop.permute.xlu0 %922
        %924 = vrot.lane.b32.xlu0 %v905, 16
        %v925 = vpop.permute.xlu0 %924
        %926 = vrot.lane.b32.xlu0 %v906, 16
        %v927 = vpop.permute.xlu0 %926
        %928 = vrot.lane.b32.xlu0 %v907, 16
        %v929 = vpop.permute.xlu0 %928
        %930 = vrot.lane.b32.xlu0 %v908, 16
        %v931 = vpop.permute.xlu0 %930
        %932 = vrot.lane.b32.xlu0 %v909, 16
        %v933 = vpop.permute.xlu0 %932
        %vm942 = vcmask 195712
        %943 = vst.msk [vmem:[#allocation4] sm:$0xff] %vm942, %v919
        %944 = vst.msk [vmem:[#allocation4 + $0x8] sm:$0xff] %vm942, %v921
        %945 = vst.msk [vmem:[#allocation4 + $0x10] sm:$0xff] %vm942, %v923
        %946 = vst.msk [vmem:[#allocation4 + $0x18] sm:$0xff] %vm942, %v925
        %947 = vst.msk [vmem:[#allocation4 + $0x20] sm:$0xff] %vm942, %v927
        %948 = vst.msk [vmem:[#allocation4 + $0x28] sm:$0xff] %vm942, %v929
        %949 = vst.msk [vmem:[#allocation4 + $0x30] sm:$0xff] %vm942, %v931
        %950 = vst.msk [vmem:[#allocation4 + $0x38] sm:$0xff] %vm942, %v933
        %v951 = vld [vmem:[%s828 + $0x7] sm:$0xff]
        %v952 = vld [vmem:[%s828 + $0x1f] sm:$0xff]
        %v953 = vld [vmem:[%s828 + $0x37] sm:$0xff]
        %v954 = vld [vmem:[%s828 + $0x4f] sm:$0xff]
        %v955 = vld [vmem:[%s828 + $0x67] sm:$0xff]
        %v956 = vld [vmem:[%s828 + $0x7f] sm:$0xff]
        %v957 = vld [vmem:[%s828 + $0x97] sm:$0xff]
        %v958 = vld [vmem:[%s828 + $0xaf] sm:$0xff]
        %967 = vrot.lane.b32.xlu0 %v951, 24
        %v968 = vpop.permute.xlu0 %967
        %969 = vrot.lane.b32.xlu0 %v952, 24
        %v970 = vpop.permute.xlu0 %969
        %971 = vrot.lane.b32.xlu0 %v953, 24
        %v972 = vpop.permute.xlu0 %971
        %973 = vrot.lane.b32.xlu0 %v954, 24
        %v974 = vpop.permute.xlu0 %973
        %975 = vrot.lane.b32.xlu0 %v955, 24
        %v976 = vpop.permute.xlu0 %975
        %977 = vrot.lane.b32.xlu0 %v956, 24
        %v978 = vpop.permute.xlu0 %977
        %979 = vrot.lane.b32.xlu0 %v957, 24
        %v980 = vpop.permute.xlu0 %979
        %981 = vrot.lane.b32.xlu0 %v958, 24
        %v982 = vpop.permute.xlu0 %981
        %vm991 = vcmask 261312
        %992 = vst.msk [vmem:[#allocation4] sm:$0xff] %vm991, %v968
        %993 = vst.msk [vmem:[#allocation4 + $0x8] sm:$0xff] %vm991, %v970
        %994 = vst.msk [vmem:[#allocation4 + $0x10] sm:$0xff] %vm991, %v972
        %995 = vst.msk [vmem:[#allocation4 + $0x18] sm:$0xff] %vm991, %v974
        %996 = vst.msk [vmem:[#allocation4 + $0x20] sm:$0xff] %vm991, %v976
        %997 = vst.msk [vmem:[#allocation4 + $0x28] sm:$0xff] %vm991, %v978
        %998 = vst.msk [vmem:[#allocation4 + $0x30] sm:$0xff] %vm991, %v980
        %999 = vst.msk [vmem:[#allocation4 + $0x38] sm:$0xff] %vm991, %v982
        %v1000 = vld [vmem:[%s828 + $0x8] sm:$0xff]
        %v1001 = vld [vmem:[%s828 + $0x20] sm:$0xff]
        %v1002 = vld [vmem:[%s828 + $0x38] sm:$0xff]
        %v1003 = vld [vmem:[%s828 + $0x50] sm:$0xff]
        %v1004 = vld [vmem:[%s828 + $0x68] sm:$0xff]
        %v1005 = vld [vmem:[%s828 + $0x80] sm:$0xff]
        %v1006 = vld [vmem:[%s828 + $0x98] sm:$0xff]
        %v1007 = vld [vmem:[%s828 + $0xb0] sm:$0xff]
        %1016 = vrot.lane.b32.xlu0 %v1000, 32
        %v1017 = vpop.permute.xlu0 %1016
        %1018 = vrot.lane.b32.xlu0 %v1001, 32
        %v1019 = vpop.permute.xlu0 %1018
        %1020 = vrot.lane.b32.xlu0 %v1002, 32
        %v1021 = vpop.permute.xlu0 %1020
        %1022 = vrot.lane.b32.xlu0 %v1003, 32
        %v1023 = vpop.permute.xlu0 %1022
        %1024 = vrot.lane.b32.xlu0 %v1004, 32
        %v1025 = vpop.permute.xlu0 %1024
        %1026 = vrot.lane.b32.xlu0 %v1005, 32
        %v1027 = vpop.permute.xlu0 %1026
        %1028 = vrot.lane.b32.xlu0 %v1006, 32
        %v1029 = vpop.permute.xlu0 %1028
        %1030 = vrot.lane.b32.xlu0 %v1007, 32
        %v1031 = vpop.permute.xlu0 %1030
        %vm1040 = vcmask 326912
        %1041 = vst.msk [vmem:[#allocation4] sm:$0xff] %vm1040, %v1017
        %1042 = vst.msk [vmem:[#allocation4 + $0x8] sm:$0xff] %vm1040, %v1019
        %1043 = vst.msk [vmem:[#allocation4 + $0x10] sm:$0xff] %vm1040, %v1021
        %1044 = vst.msk [vmem:[#allocation4 + $0x18] sm:$0xff] %vm1040, %v1023
        %1045 = vst.msk [vmem:[#allocation4 + $0x20] sm:$0xff] %vm1040, %v1025
        %1046 = vst.msk [vmem:[#allocation4 + $0x28] sm:$0xff] %vm1040, %v1027
        %1047 = vst.msk [vmem:[#allocation4 + $0x30] sm:$0xff] %vm1040, %v1029
        %1048 = vst.msk [vmem:[#allocation4 + $0x38] sm:$0xff] %vm1040, %v1031
        %v1049 = vld [vmem:[%s828 + $0x9] sm:$0xff]
        %v1050 = vld [vmem:[%s828 + $0x21] sm:$0xff]
        %v1051 = vld [vmem:[%s828 + $0x39] sm:$0xff]
        %v1052 = vld [vmem:[%s828 + $0x51] sm:$0xff]
        %v1053 = vld [vmem:[%s828 + $0x69] sm:$0xff]
        %v1054 = vld [vmem:[%s828 + $0x81] sm:$0xff]
        %v1055 = vld [vmem:[%s828 + $0x99] sm:$0xff]
        %v1056 = vld [vmem:[%s828 + $0xb1] sm:$0xff]
        %1065 = vrot.lane.b32.xlu0 %v1049, 40
        %v1066 = vpop.permute.xlu0 %1065
        %1067 = vrot.lane.b32.xlu0 %v1050, 40
        %v1068 = vpop.permute.xlu0 %1067
        %1069 = vrot.lane.b32.xlu0 %v1051, 40
        %v1070 = vpop.permute.xlu0 %1069
        %1071 = vrot.lane.b32.xlu0 %v1052, 40
        %v1072 = vpop.permute.xlu0 %1071
        %1073 = vrot.lane.b32.xlu0 %v1053, 40
        %v1074 = vpop.permute.xlu0 %1073
        %1075 = vrot.lane.b32.xlu0 %v1054, 40
        %v1076 = vpop.permute.xlu0 %1075
        %1077 = vrot.lane.b32.xlu0 %v1055, 40
        %v1078 = vpop.permute.xlu0 %1077
        %1079 = vrot.lane.b32.xlu0 %v1056, 40
        %v1080 = vpop.permute.xlu0 %1079
        %vm1089 = vcmask 392512
        %1090 = vst.msk [vmem:[#allocation4] sm:$0xff] %vm1089, %v1066
        %1091 = vst.msk [vmem:[#allocation4 + $0x8] sm:$0xff] %vm1089, %v1068
        %1092 = vst.msk [vmem:[#allocation4 + $0x10] sm:$0xff] %vm1089, %v1070
        %1093 = vst.msk [vmem:[#allocation4 + $0x18] sm:$0xff] %vm1089, %v1072
        %1094 = vst.msk [vmem:[#allocation4 + $0x20] sm:$0xff] %vm1089, %v1074
        %1095 = vst.msk [vmem:[#allocation4 + $0x28] sm:$0xff] %vm1089, %v1076
        %1096 = vst.msk [vmem:[#allocation4 + $0x30] sm:$0xff] %vm1089, %v1078
        %1097 = vst.msk [vmem:[#allocation4 + $0x38] sm:$0xff] %vm1089, %v1080
        %s1098 = scalar_lea.vmem [#allocation2], 48
        %v1099 = vld [vmem:[%s1098 + $0x7] sm:$0xff]
        %v1100 = vld [vmem:[%s1098 + $0x1f] sm:$0xff]
        %v1101 = vld [vmem:[%s1098 + $0x37] sm:$0xff]
        %v1102 = vld [vmem:[%s1098 + $0x4f] sm:$0xff]
        %v1103 = vld [vmem:[%s1098 + $0x67] sm:$0xff]
        %v1104 = vld [vmem:[%s1098 + $0x7f] sm:$0xff]
        %v1105 = vld [vmem:[%s1098 + $0x97] sm:$0xff]
        %v1106 = vld [vmem:[%s1098 + $0xaf] sm:$0xff]
        %1115 = vrot.lane.b32.xlu0 %v1099, 48
        %v1116 = vpop.permute.xlu0 %1115
        %1117 = vrot.lane.b32.xlu0 %v1100, 48
        %v1118 = vpop.permute.xlu0 %1117
        %1119 = vrot.lane.b32.xlu0 %v1101, 48
        %v1120 = vpop.permute.xlu0 %1119
        %1121 = vrot.lane.b32.xlu0 %v1102, 48
        %v1122 = vpop.permute.xlu0 %1121
        %1123 = vrot.lane.b32.xlu0 %v1103, 48
        %v1124 = vpop.permute.xlu0 %1123
        %1125 = vrot.lane.b32.xlu0 %v1104, 48
        %v1126 = vpop.permute.xlu0 %1125
        %1127 = vrot.lane.b32.xlu0 %v1105, 48
        %v1128 = vpop.permute.xlu0 %1127
        %1129 = vrot.lane.b32.xlu0 %v1106, 48
        %v1130 = vpop.permute.xlu0 %1129
        %vm1139 = vcmask 458112
        %1140 = vst.msk [vmem:[#allocation4] sm:$0xff] %vm1139, %v1116
        %1141 = vst.msk [vmem:[#allocation4 + $0x8] sm:$0xff] %vm1139, %v1118
        %1142 = vst.msk [vmem:[#allocation4 + $0x10] sm:$0xff] %vm1139, %v1120
        %1143 = vst.msk [vmem:[#allocation4 + $0x18] sm:$0xff] %vm1139, %v1122
        %1144 = vst.msk [vmem:[#allocation4 + $0x20] sm:$0xff] %vm1139, %v1124
        %1145 = vst.msk [vmem:[#allocation4 + $0x28] sm:$0xff] %vm1139, %v1126
        %1146 = vst.msk [vmem:[#allocation4 + $0x30] sm:$0xff] %vm1139, %v1128
        %1147 = vst.msk [vmem:[#allocation4 + $0x38] sm:$0xff] %vm1139, %v1130
        %v1148 = vld [vmem:[%s1098 + $0x8] sm:$0xff]
        %v1149 = vld [vmem:[%s1098 + $0x20] sm:$0xff]
        %v1150 = vld [vmem:[%s1098 + $0x38] sm:$0xff]
        %v1151 = vld [vmem:[%s1098 + $0x50] sm:$0xff]
        %v1152 = vld [vmem:[%s1098 + $0x68] sm:$0xff]
        %v1153 = vld [vmem:[%s1098 + $0x80] sm:$0xff]
        %v1154 = vld [vmem:[%s1098 + $0x98] sm:$0xff]
        %v1155 = vld [vmem:[%s1098 + $0xb0] sm:$0xff]
        %1164 = vrot.lane.b32.xlu0 %v1148, 56
        %v1165 = vpop.permute.xlu0 %1164
        %1166 = vrot.lane.b32.xlu0 %v1149, 56
        %v1167 = vpop.permute.xlu0 %1166
        %1168 = vrot.lane.b32.xlu0 %v1150, 56
        %v1169 = vpop.permute.xlu0 %1168
        %1170 = vrot.lane.b32.xlu0 %v1151, 56
        %v1171 = vpop.permute.xlu0 %1170
        %1172 = vrot.lane.b32.xlu0 %v1152, 56
        %v1173 = vpop.permute.xlu0 %1172
        %1174 = vrot.lane.b32.xlu0 %v1153, 56
        %v1175 = vpop.permute.xlu0 %1174
        %1176 = vrot.lane.b32.xlu0 %v1154, 56
        %v1177 = vpop.permute.xlu0 %1176
        %1178 = vrot.lane.b32.xlu0 %v1155, 56
        %v1179 = vpop.permute.xlu0 %1178
        %vm1188 = vcmask 523712
        %1189 = vst.msk [vmem:[#allocation4] sm:$0xff] %vm1188, %v1165
        %1190 = vst.msk [vmem:[#allocation4 + $0x8] sm:$0xff] %vm1188, %v1167
        %1191 = vst.msk [vmem:[#allocation4 + $0x10] sm:$0xff] %vm1188, %v1169
        %1192 = vst.msk [vmem:[#allocation4 + $0x18] sm:$0xff] %vm1188, %v1171
        %1193 = vst.msk [vmem:[#allocation4 + $0x20] sm:$0xff] %vm1188, %v1173
        %1194 = vst.msk [vmem:[#allocation4 + $0x28] sm:$0xff] %vm1188, %v1175
        %1195 = vst.msk [vmem:[#allocation4 + $0x30] sm:$0xff] %vm1188, %v1177
        %1196 = vst.msk [vmem:[#allocation4 + $0x38] sm:$0xff] %vm1188, %v1179
        %v1197 = vld [vmem:[%s1098 + $0x9] sm:$0xff]
        %v1198 = vld [vmem:[%s1098 + $0x21] sm:$0xff]
        %v1199 = vld [vmem:[%s1098 + $0x39] sm:$0xff]
        %v1200 = vld [vmem:[%s1098 + $0x51] sm:$0xff]
        %v1201 = vld [vmem:[%s1098 + $0x69] sm:$0xff]
        %v1202 = vld [vmem:[%s1098 + $0x81] sm:$0xff]
        %v1203 = vld [vmem:[%s1098 + $0x99] sm:$0xff]
        %v1204 = vld [vmem:[%s1098 + $0xb1] sm:$0xff]
        %1213 = vrot.lane.b32.xlu0 %v1197, 64
        %v1214 = vpop.permute.xlu0 %1213
        %1215 = vrot.lane.b32.xlu0 %v1198, 64
        %v1216 = vpop.permute.xlu0 %1215
        %1217 = vrot.lane.b32.xlu0 %v1199, 64
        %v1218 = vpop.permute.xlu0 %1217
        %1219 = vrot.lane.b32.xlu0 %v1200, 64
        %v1220 = vpop.permute.xlu0 %1219
        %1221 = vrot.lane.b32.xlu0 %v1201, 64
        %v1222 = vpop.permute.xlu0 %1221
        %1223 = vrot.lane.b32.xlu0 %v1202, 64
        %v1224 = vpop.permute.xlu0 %1223
        %1225 = vrot.lane.b32.xlu0 %v1203, 64
        %v1226 = vpop.permute.xlu0 %1225
        %1227 = vrot.lane.b32.xlu0 %v1204, 64
        %v1228 = vpop.permute.xlu0 %1227
        %vm1237 = vcmask 589312
        %1238 = vst.msk [vmem:[#allocation4] sm:$0xff] %vm1237, %v1214
        %1239 = vst.msk [vmem:[#allocation4 + $0x8] sm:$0xff] %vm1237, %v1216
        %1240 = vst.msk [vmem:[#allocation4 + $0x10] sm:$0xff] %vm1237, %v1218
        %1241 = vst.msk [vmem:[#allocation4 + $0x18] sm:$0xff] %vm1237, %v1220
        %1242 = vst.msk [vmem:[#allocation4 + $0x20] sm:$0xff] %vm1237, %v1222
        %1243 = vst.msk [vmem:[#allocation4 + $0x28] sm:$0xff] %vm1237, %v1224
        %1244 = vst.msk [vmem:[#allocation4 + $0x30] sm:$0xff] %vm1237, %v1226
        %1245 = vst.msk [vmem:[#allocation4 + $0x38] sm:$0xff] %vm1237, %v1228
        %v1246 = vld [vmem:[%s389] sm:$0xff]
        %v1247 = vld [vmem:[%s389 + $0x10] sm:$0xff]
        %v1248 = vld [vmem:[%s389 + $0x20] sm:$0xff]
        %v1249 = vld [vmem:[%s389 + $0x30] sm:$0xff]
        %v1250 = vld [vmem:[%s389 + $0x40] sm:$0xff]
        %v1251 = vld [vmem:[%s389 + $0x50] sm:$0xff]
        %v1252 = vld [vmem:[%s389 + $0x60] sm:$0xff]
        %v1253 = vld [vmem:[%s389 + $0x70] sm:$0xff]
        %1262 = vrot.lane.b32.xlu0 %v1246, 72
        %v1263 = vpop.permute.xlu0 %1262
        %1264 = vrot.lane.b32.xlu0 %v1247, 72
        %v1265 = vpop.permute.xlu0 %1264
        %1266 = vrot.lane.b32.xlu0 %v1248, 72
        %v1267 = vpop.permute.xlu0 %1266
        %1268 = vrot.lane.b32.xlu0 %v1249, 72
        %v1269 = vpop.permute.xlu0 %1268
        %1270 = vrot.lane.b32.xlu0 %v1250, 72
        %v1271 = vpop.permute.xlu0 %1270
        %1272 = vrot.lane.b32.xlu0 %v1251, 72
        %v1273 = vpop.permute.xlu0 %1272
        %1274 = vrot.lane.b32.xlu0 %v1252, 72
        %v1275 = vpop.permute.xlu0 %1274
        %1276 = vrot.lane.b32.xlu0 %v1253, 72
        %v1277 = vpop.permute.xlu0 %1276
        %vm1286 = vcmask 622144
        %1287 = vst.msk [vmem:[#allocation4] sm:$0xff] %vm1286, %v1263
        %1288 = vst.msk [vmem:[#allocation4 + $0x8] sm:$0xff] %vm1286, %v1265
        %1289 = vst.msk [vmem:[#allocation4 + $0x10] sm:$0xff] %vm1286, %v1267
        %1290 = vst.msk [vmem:[#allocation4 + $0x18] sm:$0xff] %vm1286, %v1269
        %1291 = vst.msk [vmem:[#allocation4 + $0x20] sm:$0xff] %vm1286, %v1271
        %1292 = vst.msk [vmem:[#allocation4 + $0x28] sm:$0xff] %vm1286, %v1273
        %1293 = vst.msk [vmem:[#allocation4 + $0x30] sm:$0xff] %vm1286, %v1275
        %1294 = vst.msk [vmem:[#allocation4 + $0x38] sm:$0xff] %vm1286, %v1277
        %v1295 = vld [vmem:[#allocation4] sm:$0xff]
        %v1296 = vld [vmem:[#allocation4 + $0x8] sm:$0xff]
        %v1297 = vld [vmem:[#allocation4 + $0x10] sm:$0xff]
        %v1298 = vld [vmem:[#allocation4 + $0x18] sm:$0xff]
        %v1299 = vld [vmem:[#allocation4 + $0x20] sm:$0xff]
        %v1300 = vld [vmem:[#allocation4 + $0x28] sm:$0xff]
        %v1301 = vld [vmem:[#allocation4 + $0x30] sm:$0xff]
        %v1302 = vld [vmem:[#allocation4 + $0x38] sm:$0xff]
        %v1303 = vld [vmem:[%s3] sm:$0xff]
        %v1304 = vld [vmem:[%s3 + $0x8] sm:$0xff]
        %v1305 = vld [vmem:[%s3 + $0x10] sm:$0xff]
        %v1306 = vld [vmem:[%s3 + $0x18] sm:$0xff]
        %v1307 = vld [vmem:[%s3 + $0x20] sm:$0xff]
        %v1308 = vld [vmem:[%s3 + $0x28] sm:$0xff]
        %v1309 = vld [vmem:[%s3 + $0x30] sm:$0xff]
        %v1310 = vld [vmem:[%s3 + $0x38] sm:$0xff]
        %v1311 = vld [vmem:[%s3 + $0x40] sm:$0xff]
        %v1312 = vld [vmem:[%s3 + $0x48] sm:$0xf]
        %v1313 = vld [vmem:[%s4] sm:$0x1]
        %v1315 = vlaneseq
        %v1316 = vshrl.u32 %v1315, 7
        %v1317 = vsub.s32 0, %v1316
        %v1318 = vrot.slane %v1313, %v1317
        %vm1320 = vcmask 621568
        %v1322 = vsel %vm1320, %v1295, 0
        %v1325 = vsel %vm1320, %v1296, 0
        %v1328 = vsel %vm1320, %v1297, 0
        %v1331 = vsel %vm1320, %v1298, 0
        %v1334 = vsel %vm1320, %v1299, 0
        %v1337 = vsel %vm1320, %v1300, 0
        %v1340 = vsel %vm1320, %v1301, 0
        %v1343 = vsel %vm1320, %v1302, 0
        %v1346 = vsel %vm682, %v1312, 0
        %1348 = vmatprep.subr.mxu0 0.0
        %1349 = vmatpush1.msra.mxu0 %v1303
        %1350 = vmatprep.subr.mxu0 0.0
        %1351 = vmatpush1.msra.mxu0 %v1304
        %1352 = vmatprep.subr.mxu0 0.0
        %1353 = vmatpush1.msra.mxu0 %v1305
        %1354 = vmatprep.subr.mxu0 0.0
        %1355 = vmatpush1.msra.mxu0 %v1306
        %1356 = vmatprep.subr.mxu0 0.0
        %1357 = vmatpush1.msra.mxu0 %v1307
        %1358 = vmatprep.subr.mxu0 0.0
        %1359 = vmatpush1.msra.mxu0 %v1308
        %1360 = vmatprep.subr.mxu0 0.0
        %1361 = vmatpush1.msra.mxu0 %v1309
        %1362 = vmatprep.subr.mxu0 0.0
        %1363 = vmatpush1.msra.mxu0 %v1310
        %1364 = vmatprep.subr.mxu0 0.0
        %1365 = vmatpush1.msra.mxu0 %v1311
        %1366 = vmatprep.subr.mxu0 0.0
        %1367 = vmatpush1.msra.mxu0 %v1346
        %1368 = vmatprep.subr.mxu0 0.0
        %1369 = vmatpush1.msra.mxu0 0.0
        %1370 = vmatprep.subr.mxu0 0.0
        %1371 = vmatpush1.msra.mxu0 0.0
        %1372 = vmatprep.subr.mxu0 0.0
        %1373 = vmatpush1.msra.mxu0 0.0
        %1374 = vmatprep.subr.mxu0 0.0
        %1375 = vmatpush1.msra.mxu0 0.0
        %1376 = vmatprep.subr.mxu0 0.0
        %1377 = vmatpush1.msra.mxu0 0.0
        %1378 = vmatprep.subr.mxu0 0.0
        %1379 = vmatpush1.msra.mxu0 0.0
        %1380 = vmatprep.subr.mxu0 0.0
        %1381 = vmatpush1.msra.mxu0 0.0
        %1382 = vmatprep.subr.mxu0 0.0
        %1383 = vmatpush1.msra.mxu0 0.0
        %1384 = vmatprep.subr.mxu0 0.0
        %1385 = vmatpush1.msra.mxu0 0.0
        %1386 = vmatprep.subr.mxu0 0.0
        %1387 = vmatpush1.msra.mxu0 0.0
        %1388 = vmatprep.subr.mxu0 0.0
        %1389 = vmatpush1.msra.mxu0 0.0
        %1390 = vmatprep.subr.mxu0 0.0
        %1391 = vmatpush1.msra.mxu0 0.0
        %1392 = vmatprep.subr.mxu0 0.0
        %1393 = vmatpush1.msra.mxu0 0.0
        %1394 = vmatprep.subr.mxu0 0.0
        %1395 = vmatpush1.msra.mxu0 0.0
        %1396 = vmatprep.subr.mxu0 0.0
        %1397 = vmatpush1.msra.mxu0 0.0
        %1398 = vmatprep.subr.mxu0 0.0
        %1399 = vmatpush1.msra.mxu0 0.0
        %1400 = vmatprep.subr.mxu0 0.0
        %1401 = vmatpush1.msra.mxu0 0.0
        %1402 = vmatprep.subr.mxu0 0.0
        %1403 = vmatpush1.msra.mxu0 0.0
        %1404 = vmatprep.subr.mxu0 0.0
        %1405 = vmatpush1.msra.mxu0 0.0
        %1406 = vmatprep.subr.mxu0 0.0
        %1407 = vmatpush1.msra.mxu0 0.0
        %1408 = vmatprep.subr.mxu0 0.0
        %1409 = vmatpush1.msra.mxu0 0.0
        %1410 = vmatprep.subr.mxu0 0.0
        %1411 = vmatpush1.msra.mxu0 0.0
        %1412 = vmatprep.mubr.f32.mxu0 0.0
        %1413 = vmatmul.mubr.f32.gmra.mrb[0].mxu0 %v1322
        %v1414 = vpop.f32.mrb[0].mxu0
        %v1415 = vadd.f32 %v1318, %v1414
        %v1416 = vpop.f32.mrb[0].mxu0
        %1417 = vmatprep.mubr.f32.mxu0 0.0
        %1418 = vmatmul.mubr.f32.gmra.mrb[0].mxu0 %v1325
        %v1419 = vpop.f32.mrb[0].mxu0
        %v1420 = vadd.f32 %v1318, %v1419
        %v1421 = vpop.f32.mrb[0].mxu0
        %1422 = vmatprep.mubr.f32.mxu0 0.0
        %1423 = vmatmul.mubr.f32.gmra.mrb[0].mxu0 %v1328
        %v1424 = vpop.f32.mrb[0].mxu0
        %v1425 = vadd.f32 %v1318, %v1424
        %v1426 = vpop.f32.mrb[0].mxu0
        %1427 = vmatprep.mubr.f32.mxu0 0.0
        %1428 = vmatmul.mubr.f32.gmra.mrb[0].mxu0 %v1331
        %v1429 = vpop.f32.mrb[0].mxu0
        %v1430 = vadd.f32 %v1318, %v1429
        %v1431 = vpop.f32.mrb[0].mxu0
        %1432 = vmatprep.mubr.f32.mxu0 0.0
        %1433 = vmatmul.mubr.f32.gmra.mrb[0].mxu0 %v1334
        %v1434 = vpop.f32.mrb[0].mxu0
        %v1435 = vadd.f32 %v1318, %v1434
        %v1436 = vpop.f32.mrb[0].mxu0
        %1437 = vmatprep.mubr.f32.mxu0 0.0
        %1438 = vmatmul.mubr.f32.gmra.mrb[0].mxu0 %v1337
        %v1439 = vpop.f32.mrb[0].mxu0
        %v1440 = vadd.f32 %v1318, %v1439
        %v1441 = vpop.f32.mrb[0].mxu0
        %1442 = vmatprep.mubr.f32.mxu0 0.0
        %1443 = vmatmul.mubr.f32.gmra.mrb[0].mxu0 %v1340
        %v1444 = vpop.f32.mrb[0].mxu0
        %v1445 = vadd.f32 %v1318, %v1444
        %v1446 = vpop.f32.mrb[0].mxu0
        %1447 = vmatprep.mubr.f32.mxu0 0.0
        %1448 = vmatmul.mubr.f32.gmra.mrb[0].mxu0 %v1343
        %v1449 = vpop.f32.mrb[0].mxu0
        %v1450 = vadd.f32 %v1318, %v1449
        %v1451 = vpop.f32.mrb[0].mxu0
        %1452 = vdwg.mxu0
        %v1453 = vmax.f32 %v1415, 0.0
        %v1454 = vmax.f32 %v1420, 0.0
        %v1455 = vmax.f32 %v1425, 0.0
        %v1456 = vmax.f32 %v1430, 0.0
        %v1457 = vmax.f32 %v1435, 0.0
        %v1458 = vmax.f32 %v1440, 0.0
        %v1459 = vmax.f32 %v1445, 0.0
        %v1460 = vmax.f32 %v1450, 0.0
        %1461 = vst.msk [vmem:[%s217] sm:$0xff] %vm799, %v1453
        %1462 = vst.msk [vmem:[%s217 + $0x8] sm:$0xff] %vm799, %v1454
        %1463 = vst.msk [vmem:[%s217 + $0x10] sm:$0xff] %vm799, %v1455
        %1464 = vst.msk [vmem:[%s217 + $0x18] sm:$0xff] %vm799, %v1456
        %1465 = vst.msk [vmem:[%s217 + $0x20] sm:$0xff] %vm799, %v1457
        %1466 = vst.msk [vmem:[%s217 + $0x28] sm:$0xff] %vm799, %v1458
        %1467 = vst.msk [vmem:[%s217 + $0x30] sm:$0xff] %vm799, %v1459
        %1468 = vst.msk [vmem:[%s217 + $0x38] sm:$0xff] %vm799, %v1460
        %s1469 = sand.u32 %s137, 1
        %s1470 = scalar_lea.sflag [#allocation6], %s1469
        %s1471 = sand.u32 %s137, 1
        %s1472 = smul.addr %s1471, 64
        %s1473 = scalar_lea.vmem [#allocation5], %s1472
        // Predicated region
        $region41: #{tpu_custom_call.1} parent=39 // pred_check
          %p1474 = pneg %p147
        $region42: #{tpu_custom_call.1} parent=39 // pred_check_branch
          %1476 = sbr.rel (%p1474) target = $region44
        $region43: #{tpu_custom_call.1} parent=39 // pred_region
          %s1478 = ssub.s32 1024, 1024
          %1479 = vsyncadd %s1470, %s1478
          %s1480 = smul.addr %s19, 8
          %s1481 = smul.addr %s1480, 128
          %s1482 = scalar_lea.hbm %s5, %s1481
          %s1483 = sshll.u32 %s1473, 4
          %s1484 = int_to_ptr.vmem [resolvable:$true] %s1483
          %1489 = dma.vmem_to_hbm [thread:$0]  %s1484, 1024, %s1482, %s1470, 128, 128, 8
        $region44: #{tpu_custom_call.1} parent=39 // pred_fallthru
          _
      $region40: #{tpu_custom_call.1} parent=5 // pred_fallthru
        _
      %p1490 = scmp.le.s32.totalorder 2, %s14
      // Predicated region
      $region45: #{tpu_custom_call.1} parent=5 // pred_check
        %p1491 = pneg %p1490
      $region46: #{tpu_custom_call.1} parent=5 // pred_check_branch
        %1493 = sbr.rel (%p1491) target = $region48
      $region47: #{tpu_custom_call.1} parent=5 // pred_region
        %s1494 = ssub.s32 %s14, 2
        // Predicated region
        $region49: #{tpu_custom_call.1} parent=47 // pred_check
          %p1495 = pneg %p153
        $region50: #{tpu_custom_call.1} parent=47 // pred_check_branch
          %1497 = sbr.rel (%p1495) target = $region52
        $region51: #{tpu_custom_call.1} parent=47 // pred_region
          %s1498 = sand.u32 %s138, 1
          %s1499 = scalar_lea.sflag [#allocation6], %s1498
          %s1500 = sand.u32 %s138, 1
          %s1501 = smul.addr %s1500, 64
          %s1502 = scalar_lea.vmem [#allocation5], %s1501
          %1503 = dma.done %s1499, 1024
        $region52: #{tpu_custom_call.1} parent=47 // pred_fallthru
          _
      $region48: #{tpu_custom_call.1} parent=5 // pred_fallthru
        _
    $region6: #{tpu_custom_call.1} parent=1 // loop_footer
      %s18 = sadd.s32 1, %s14
    $region7: #{tpu_custom_call.1} parent=1 // loop_footer_branch
      %13 = sbr.rel target = $region3
    $region8: #{tpu_custom_call.1} parent=1 // loop_exit
      _
    %1504 = vsyncpa [#allocation6], 1
    %s1505 = scalar_lea.sflag [#allocation6], 1
    %1506 = vsyncpa %s1505, 1

</llo_original>
